<compile_context>
chip_gen: v5e
topology: v5e:2x2
jax: 0.10.0
libtpu: 0.0.40
codegen_flags: <defaults>
</compile_context>

<pallas_src>
import functools

import jax
import jax.numpy as jnp
from jax import lax
from jax.experimental import pallas as pl


def lstm_kernel(sent_ref, table_ref, wih0_ref, whh0_ref, b0_ref,
                wih1_ref, whh1_ref, b1_ref, wout_ref, bout_ref,
                out_ref):
    S = sent_ref.shape[0]
    V, E = table_ref.shape
    H = whh0_ref.shape[0]
    f32 = jnp.float32

    # ---- fused embedding gather: one-hot (S,V) @ table (V,E) on the MXU ----
    ids = sent_ref[...]                                        # (S,1) int32
    cols = lax.broadcasted_iota(jnp.int32, (S, V), 1)
    onehot = (cols == ids).astype(f32)                         # (S,V)
    emb = jnp.dot(onehot, table_ref[...],
                  preferred_element_type=f32)                  # (S,E)

    # ---- batched layer-0 input projection (off the serial chain) ----
    pre0 = (jnp.dot(emb, wih0_ref[...], preferred_element_type=f32)
            + b0_ref[...])                                     # (S,4H)

    # Hoist loop-invariant weight loads into vregs once.
    whh0 = whh0_ref[...]
    whh1 = whh1_ref[...]
    wih1 = wih1_ref[...]
    b1 = b1_ref[...]

    def gates(z):
        # Gate columns pre-permuted to (i, f, o, g): one contiguous sigmoid
        # over 3H lanes, one tanh over the last H lanes.
        sig = jax.nn.sigmoid(z[:, 0:3 * H])
        i = sig[:, 0 * H:1 * H]
        f = sig[:, 1 * H:2 * H]
        o = sig[:, 2 * H:3 * H]
        g = jnp.tanh(z[:, 3 * H:4 * H])
        return i, f, g, o

    zero = jnp.zeros((1, H), f32)
    h0, c0 = zero, zero
    h1, c1 = zero, zero
    x1_pre = None            # layer-1 input projection of the pending h0
    h1_rows = []

    # TODO(synk): nn.LSTM dropout=0.2 only fires in training mode between
    # layers; eval/inference semantics (no dropout) are implemented here.

    # ---- wavefront over the two layers (fully unrolled; S is static) ----
    # Step w computes layer-0 step w and layer-1 step w-1; the two recurrent
    # matmuls inside a step are independent, so they overlap in the MXU.
    for w in range(S + 1):
        # Issue both recurrent matmuls back-to-back against the OLD carries.
        if w < S:
            z0 = pre0[w:w + 1, :] + jnp.dot(h0, whh0,
                                            preferred_element_type=f32)
        if w >= 1:
            z1 = x1_pre + jnp.dot(h1, whh1, preferred_element_type=f32)
        if w < S:
            i0, f0, g0, o0 = gates(z0)
            c0 = f0 * c0 + i0 * g0
            h0 = o0 * jnp.tanh(c0)
            # Layer-1 input projection for the NEXT wavefront step.
            x1_pre = jnp.dot(h0, wih1, preferred_element_type=f32) + b1
        if w >= 1:
            i1, f1, g1, o1 = gates(z1)
            c1 = f1 * c1 + i1 * g1
            h1 = o1 * jnp.tanh(c1)
            h1_rows.append(h1)

    hs1 = jnp.concatenate(h1_rows, axis=0)                     # (S, H)

    # ---- batched output Linear over all timesteps (lane-dense, padded O) ----
    out_ref[...] = (jnp.dot(hs1, wout_ref[...], preferred_element_type=f32)
                    + bout_ref[...]).astype(out_ref.dtype)


def prepare_params(params):
    """One-time weight preparation (hoisted out of the forward path)."""
    H = params["whh0T"].shape[0]
    O = params["woutT"].shape[1]
    OPAD = max(128, ((O + 127) // 128) * 128)
    # PyTorch gate order (i,f,g,o) -> kernel order (i,f,o,g).
    perm = jnp.concatenate([jnp.arange(0, 2 * H),
                            jnp.arange(3 * H, 4 * H),
                            jnp.arange(2 * H, 3 * H)])
    prepped = {
        "table": params["embedding"].astype(jnp.float32),
        "wih0T": params["wih0T"][:, perm],
        "whh0T": params["whh0T"][:, perm],
        "b0":    params["b0"][:, perm],
        "wih1T": params["wih1T"][:, perm],
        "whh1T": params["whh1T"][:, perm],
        "b1":    params["b1"][:, perm],
        "woutT": jnp.zeros((H, OPAD), jnp.float32).at[:, :O].set(params["woutT"]),
        "bout":  jnp.zeros((1, OPAD), jnp.float32).at[:, :O].set(params["bout"]),
    }
    return jax.block_until_ready(prepped)


@functools.partial(jax.jit, static_argnames=("out_features",))
def lstm_network_forward(sentence, prepped, out_features):
    S = sentence.shape[0]
    V, E = prepped["table"].shape
    H = prepped["whh0T"].shape[0]
    OPAD = prepped["woutT"].shape[1]

    sent2d = sentence.reshape(S, 1).astype(jnp.int32)

    flops = (2 * S * V * E            # one-hot embedding gather matmul
             + 2 * S * E * 4 * H      # layer-0 input projection
             + 2 * S * H * 4 * H      # layer-0 recurrent matmuls
             + 2 * S * H * 4 * H      # layer-1 input projections
             + 2 * S * H * 4 * H      # layer-1 recurrent matmuls
             + 2 * S * H * OPAD)      # output Linear
    transcendentals = S * 2 * 5 * H   # (3H sigmoid + 2H tanh) per layer/step
    bytes_accessed = 4 * (S + V * E + E * 4 * H + 3 * H * 4 * H + 2 * 4 * H
                          + H * OPAD + OPAD + S * OPAD)

    # Single invocation, no grid: ~30 KB of VMEM in play (weights + a few
    # vregs), so no tiling / vmem_limit_bytes is needed on v5e/v6e/v7x.
    out_padded = pl.pallas_call(
        lstm_kernel,
        out_shape=jax.ShapeDtypeStruct((S, OPAD), jnp.float32),
        cost_estimate=pl.CostEstimate(flops=flops,
                                      transcendentals=transcendentals,
                                      bytes_accessed=bytes_accessed),
    )(sent2d, prepped["table"], prepped["wih0T"], prepped["whh0T"],
      prepped["b0"], prepped["wih1T"], prepped["whh1T"], prepped["b1"],
      prepped["woutT"], prepped["bout"])

    return out_padded[:, :out_features]


def lstm_reference(sentence, params):
    """Pure-JAX reference (canonical PyTorch gate order, same f32 math)."""
    emb = jnp.take(params["embedding"], sentence, axis=0)
    H = params["whh0T"].shape[0]

    def cell(x, h, c, wihT, whhT, b):
        z = x @ wihT + h @ whhT + b
        i = jax.nn.sigmoid(z[:, 0 * H:1 * H])
        f = jax.nn.sigmoid(z[:, 1 * H:2 * H])
        g = jnp.tanh(z[:, 2 * H:3 * H])
        o = jax.nn.sigmoid(z[:, 3 * H:4 * H])
        c = f * c + i * g
        h = o * jnp.tanh(c)
        return h, c

    h0 = c0 = h1 = c1 = jnp.zeros((1, H), jnp.float32)
    outs = []
    for t in range(emb.shape[0]):
        x = emb[t:t + 1, :]
        h0, c0 = cell(x, h0, c0, params["wih0T"], params["whh0T"], params["b0"])
        h1, c1 = cell(h0, h1, c1, params["wih1T"], params["whh1T"], params["b1"])
        outs.append(h1)
    hs = jnp.concatenate(outs, axis=0)
    return hs @ params["woutT"] + params["bout"]


def init_params(key, vocab_size, embedding_dim, hidden_dim, output_size):
    ks = jax.random.split(key, 12)
    H, E, V, O = hidden_dim, embedding_dim, vocab_size, output_size
    s = 1.0 / jnp.sqrt(H)

    emb = jax.random.normal(ks[0], (V, E), jnp.float32) * 0.1
    emb = emb.at[0].set(0.0)  # padding_idx=0

    def u(k, shape):
        return jax.random.uniform(k, shape, jnp.float32, -s, s)

    params = {
        "embedding": emb,
        # stored pre-transposed: (in_features, 4H), PyTorch gate order (i,f,g,o)
        "wih0T": u(ks[1], (E, 4 * H)),
        "whh0T": u(ks[2], (H, 4 * H)),
        "b0":    u(ks[3], (1, 4 * H)) + u(ks[4], (1, 4 * H)),  # b_ih + b_hh
        "wih1T": u(ks[5], (H, 4 * H)),
        "whh1T": u(ks[6], (H, 4 * H)),
        "b1":    u(ks[7], (1, 4 * H)) + u(ks[8], (1, 4 * H)),
        "woutT": u(ks[9], (H, O)),
        "bout":  u(ks[10], (1, O)),
    }
    return params


if __name__ == "__main__":
    vocab_size, embedding_dim, hidden_dim, output_size = 32, 16, 32, 8
    seq_len = 8

    key = jax.random.PRNGKey(0)
    kp, ks = jax.random.split(key)
    params = init_params(kp, vocab_size, embedding_dim, hidden_dim, output_size)
    prepped = prepare_params(params)          # one-time, off the forward path
    sentence = jax.random.randint(ks, (seq_len,), 0, vocab_size, jnp.int32)

    out = lstm_network_forward(sentence, prepped, output_size)
    out = jax.block_until_ready(out)
    assert out.shape == (seq_len, output_size)

    ref = lstm_reference(sentence, params)
    assert jnp.allclose(out, ref, atol=1e-2, rtol=1e-2), "mismatch vs reference"

    print("KERNEL_OK")
</pallas_src>

<mosaic_0001>
module attributes {stable_mosaic.version = 11 : i64} {
  func.func @lstm_kernel(%arg0: memref<8x1xi32, #tpu.memory_space<vmem>>, %arg1: memref<32x16xf32, #tpu.memory_space<vmem>>, %arg2: memref<16x128xf32, #tpu.memory_space<vmem>>, %arg3: memref<32x128xf32, #tpu.memory_space<vmem>>, %arg4: memref<1x128xf32, #tpu.memory_space<vmem>>, %arg5: memref<32x128xf32, #tpu.memory_space<vmem>>, %arg6: memref<32x128xf32, #tpu.memory_space<vmem>>, %arg7: memref<1x128xf32, #tpu.memory_space<vmem>>, %arg8: memref<32x128xf32, #tpu.memory_space<vmem>>, %arg9: memref<1x128xf32, #tpu.memory_space<vmem>>, %arg10: memref<8x128xf32, #tpu.memory_space<vmem>>) attributes {dimension_semantics = [], scalar_prefetch = 0 : i64, scratch_operands = 0 : i64, tpu.core_type = #tpu.core_type<tc>} {
    %c0 = arith.constant 0 : index
    %c0_0 = arith.constant 0 : index
    %0 = vector.load %arg0[%c0, %c0_0] : memref<8x1xi32, #tpu.memory_space<vmem>>, vector<8x1xi32>
    %1 = tpu.iota {dimensions = array<i32: 1>} : vector<8x32xi32>
    %2 = vector.broadcast %0 : vector<8x1xi32> to vector<8x32xi32>
    %3 = arith.cmpi eq, %1, %2 : vector<8x32xi32>
    %4 = arith.extui %3 : vector<8x32xi1> to vector<8x32xi32>
    %5 = arith.sitofp %4 : vector<8x32xi32> to vector<8x32xf32>
    %c0_1 = arith.constant 0 : index
    %c0_2 = arith.constant 0 : index
    %6 = vector.load %arg1[%c0_1, %c0_2] : memref<32x16xf32, #tpu.memory_space<vmem>>, vector<32x16xf32>
    %cst = arith.constant dense<0.000000e+00> : vector<8x16xf32>
    %7 = tpu.matmul %5, %6, %cst {dimension_numbers = #tpu.dot_dimension_numbers<[1], [0], [0], [1], [0, 0, 1, 1], [], []>} : vector<8x32xf32>, vector<32x16xf32>, vector<8x16xf32> -> vector<8x16xf32>
    %c0_3 = arith.constant 0 : index
    %c0_4 = arith.constant 0 : index
    %8 = vector.load %arg2[%c0_3, %c0_4] : memref<16x128xf32, #tpu.memory_space<vmem>>, vector<16x128xf32>
    %cst_5 = arith.constant dense<0.000000e+00> : vector<8x128xf32>
    %9 = tpu.matmul %7, %8, %cst_5 {dimension_numbers = #tpu.dot_dimension_numbers<[1], [0], [0], [1], [0, 0, 1, 1], [], []>} : vector<8x16xf32>, vector<16x128xf32>, vector<8x128xf32> -> vector<8x128xf32>
    %c0_6 = arith.constant 0 : index
    %c0_7 = arith.constant 0 : index
    %10 = vector.load %arg4[%c0_6, %c0_7] : memref<1x128xf32, #tpu.memory_space<vmem>>, vector<1x128xf32>
    %11 = vector.broadcast %10 : vector<1x128xf32> to vector<8x128xf32>
    %12 = arith.addf %9, %11 : vector<8x128xf32>
    %c0_8 = arith.constant 0 : index
    %c0_9 = arith.constant 0 : index
    %13 = vector.load %arg3[%c0_8, %c0_9] : memref<32x128xf32, #tpu.memory_space<vmem>>, vector<32x128xf32>
    %c0_10 = arith.constant 0 : index
    %c0_11 = arith.constant 0 : index
    %14 = vector.load %arg6[%c0_10, %c0_11] : memref<32x128xf32, #tpu.memory_space<vmem>>, vector<32x128xf32>
    %c0_12 = arith.constant 0 : index
    %c0_13 = arith.constant 0 : index
    %15 = vector.load %arg5[%c0_12, %c0_13] : memref<32x128xf32, #tpu.memory_space<vmem>>, vector<32x128xf32>
    %c0_14 = arith.constant 0 : index
    %c0_15 = arith.constant 0 : index
    %16 = vector.load %arg7[%c0_14, %c0_15] : memref<1x128xf32, #tpu.memory_space<vmem>>, vector<1x128xf32>
    %cst_16 = arith.constant 0.000000e+00 : f32
    %17 = vector.broadcast %cst_16 : f32 to vector<1x32xf32>
    %18 = vector.extract_strided_slice %12 {offsets = [0, 0], sizes = [1, 128], strides = [1, 1]} : vector<8x128xf32> to vector<1x128xf32>
    %cst_17 = arith.constant dense<0.000000e+00> : vector<1x128xf32>
    %19 = tpu.matmul %17, %13, %cst_17 {dimension_numbers = #tpu.dot_dimension_numbers<[1], [0], [0], [1], [0, 0, 1, 1], [], []>} : vector<1x32xf32>, vector<32x128xf32>, vector<1x128xf32> -> vector<1x128xf32>
    %20 = arith.addf %18, %19 : vector<1x128xf32>
    %21 = vector.extract_strided_slice %20 {offsets = [0, 0], sizes = [1, 96], strides = [1, 1]} : vector<1x128xf32> to vector<1x96xf32>
    %22 = arith.negf %21 : vector<1x96xf32>
    %23 = math.exp %22 : vector<1x96xf32>
    %cst_18 = arith.constant 1.000000e+00 : f32
    %24 = vector.broadcast %cst_18 : f32 to vector<1x96xf32>
    %25 = arith.addf %24, %23 : vector<1x96xf32>
    %26 = arith.divf %24, %25 : vector<1x96xf32>
    %27 = vector.extract_strided_slice %26 {offsets = [0, 0], sizes = [1, 32], strides = [1, 1]} : vector<1x96xf32> to vector<1x32xf32>
    %28 = vector.extract_strided_slice %26 {offsets = [0, 32], sizes = [1, 32], strides = [1, 1]} : vector<1x96xf32> to vector<1x32xf32>
    %29 = vector.extract_strided_slice %26 {offsets = [0, 64], sizes = [1, 32], strides = [1, 1]} : vector<1x96xf32> to vector<1x32xf32>
    %30 = vector.extract_strided_slice %20 {offsets = [0, 96], sizes = [1, 32], strides = [1, 1]} : vector<1x128xf32> to vector<1x32xf32>
    %31 = math.tanh %30 : vector<1x32xf32>
    %32 = arith.mulf %28, %17 : vector<1x32xf32>
    %33 = arith.mulf %27, %31 : vector<1x32xf32>
    %34 = arith.addf %32, %33 : vector<1x32xf32>
    %35 = math.tanh %34 : vector<1x32xf32>
    %36 = arith.mulf %29, %35 : vector<1x32xf32>
    %cst_19 = arith.constant dense<0.000000e+00> : vector<1x128xf32>
    %37 = tpu.matmul %36, %15, %cst_19 {dimension_numbers = #tpu.dot_dimension_numbers<[1], [0], [0], [1], [0, 0, 1, 1], [], []>} : vector<1x32xf32>, vector<32x128xf32>, vector<1x128xf32> -> vector<1x128xf32>
    %38 = arith.addf %37, %16 : vector<1x128xf32>
    %39 = vector.extract_strided_slice %12 {offsets = [1, 0], sizes = [1, 128], strides = [1, 1]} : vector<8x128xf32> to vector<1x128xf32>
    %cst_20 = arith.constant dense<0.000000e+00> : vector<1x128xf32>
    %40 = tpu.matmul %36, %13, %cst_20 {dimension_numbers = #tpu.dot_dimension_numbers<[1], [0], [0], [1], [0, 0, 1, 1], [], []>} : vector<1x32xf32>, vector<32x128xf32>, vector<1x128xf32> -> vector<1x128xf32>
    %41 = arith.addf %39, %40 : vector<1x128xf32>
    %cst_21 = arith.constant dense<0.000000e+00> : vector<1x128xf32>
    %42 = tpu.matmul %17, %14, %cst_21 {dimension_numbers = #tpu.dot_dimension_numbers<[1], [0], [0], [1], [0, 0, 1, 1], [], []>} : vector<1x32xf32>, vector<32x128xf32>, vector<1x128xf32> -> vector<1x128xf32>
    %43 = arith.addf %38, %42 : vector<1x128xf32>
    %44 = vector.extract_strided_slice %41 {offsets = [0, 0], sizes = [1, 96], strides = [1, 1]} : vector<1x128xf32> to vector<1x96xf32>
    %45 = arith.negf %44 : vector<1x96xf32>
    %46 = math.exp %45 : vector<1x96xf32>
    %cst_22 = arith.constant 1.000000e+00 : f32
    %47 = vector.broadcast %cst_22 : f32 to vector<1x96xf32>
    %48 = arith.addf %47, %46 : vector<1x96xf32>
    %49 = arith.divf %47, %48 : vector<1x96xf32>
    %50 = vector.extract_strided_slice %49 {offsets = [0, 0], sizes = [1, 32], strides = [1, 1]} : vector<1x96xf32> to vector<1x32xf32>
    %51 = vector.extract_strided_slice %49 {offsets = [0, 32], sizes = [1, 32], strides = [1, 1]} : vector<1x96xf32> to vector<1x32xf32>
    %52 = vector.extract_strided_slice %49 {offsets = [0, 64], sizes = [1, 32], strides = [1, 1]} : vector<1x96xf32> to vector<1x32xf32>
    %53 = vector.extract_strided_slice %41 {offsets = [0, 96], sizes = [1, 32], strides = [1, 1]} : vector<1x128xf32> to vector<1x32xf32>
    %54 = math.tanh %53 : vector<1x32xf32>
    %55 = arith.mulf %51, %34 : vector<1x32xf32>
    %56 = arith.mulf %50, %54 : vector<1x32xf32>
    %57 = arith.addf %55, %56 : vector<1x32xf32>
    %58 = math.tanh %57 : vector<1x32xf32>
    %59 = arith.mulf %52, %58 : vector<1x32xf32>
    %cst_23 = arith.constant dense<0.000000e+00> : vector<1x128xf32>
    %60 = tpu.matmul %59, %15, %cst_23 {dimension_numbers = #tpu.dot_dimension_numbers<[1], [0], [0], [1], [0, 0, 1, 1], [], []>} : vector<1x32xf32>, vector<32x128xf32>, vector<1x128xf32> -> vector<1x128xf32>
    %61 = arith.addf %60, %16 : vector<1x128xf32>
    %62 = vector.extract_strided_slice %43 {offsets = [0, 0], sizes = [1, 96], strides = [1, 1]} : vector<1x128xf32> to vector<1x96xf32>
    %63 = arith.negf %62 : vector<1x96xf32>
    %64 = math.exp %63 : vector<1x96xf32>
    %cst_24 = arith.constant 1.000000e+00 : f32
    %65 = vector.broadcast %cst_24 : f32 to vector<1x96xf32>
    %66 = arith.addf %65, %64 : vector<1x96xf32>
    %67 = arith.divf %65, %66 : vector<1x96xf32>
    %68 = vector.extract_strided_slice %67 {offsets = [0, 0], sizes = [1, 32], strides = [1, 1]} : vector<1x96xf32> to vector<1x32xf32>
    %69 = vector.extract_strided_slice %67 {offsets = [0, 32], sizes = [1, 32], strides = [1, 1]} : vector<1x96xf32> to vector<1x32xf32>
    %70 = vector.extract_strided_slice %67 {offsets = [0, 64], sizes = [1, 32], strides = [1, 1]} : vector<1x96xf32> to vector<1x32xf32>
    %71 = vector.extract_strided_slice %43 {offsets = [0, 96], sizes = [1, 32], strides = [1, 1]} : vector<1x128xf32> to vector<1x32xf32>
    %72 = math.tanh %71 : vector<1x32xf32>
    %73 = arith.mulf %69, %17 : vector<1x32xf32>
    %74 = arith.mulf %68, %72 : vector<1x32xf32>
    %75 = arith.addf %73, %74 : vector<1x32xf32>
    %76 = math.tanh %75 : vector<1x32xf32>
    %77 = arith.mulf %70, %76 : vector<1x32xf32>
    %78 = vector.extract_strided_slice %12 {offsets = [2, 0], sizes = [1, 128], strides = [1, 1]} : vector<8x128xf32> to vector<1x128xf32>
    %cst_25 = arith.constant dense<0.000000e+00> : vector<1x128xf32>
    %79 = tpu.matmul %59, %13, %cst_25 {dimension_numbers = #tpu.dot_dimension_numbers<[1], [0], [0], [1], [0, 0, 1, 1], [], []>} : vector<1x32xf32>, vector<32x128xf32>, vector<1x128xf32> -> vector<1x128xf32>
    %80 = arith.addf %78, %79 : vector<1x128xf32>
    %cst_26 = arith.constant dense<0.000000e+00> : vector<1x128xf32>
    %81 = tpu.matmul %77, %14, %cst_26 {dimension_numbers = #tpu.dot_dimension_numbers<[1], [0], [0], [1], [0, 0, 1, 1], [], []>} : vector<1x32xf32>, vector<32x128xf32>, vector<1x128xf32> -> vector<1x128xf32>
    %82 = arith.addf %61, %81 : vector<1x128xf32>
    %83 = vector.extract_strided_slice %80 {offsets = [0, 0], sizes = [1, 96], strides = [1, 1]} : vector<1x128xf32> to vector<1x96xf32>
    %84 = arith.negf %83 : vector<1x96xf32>
    %85 = math.exp %84 : vector<1x96xf32>
    %cst_27 = arith.constant 1.000000e+00 : f32
    %86 = vector.broadcast %cst_27 : f32 to vector<1x96xf32>
    %87 = arith.addf %86, %85 : vector<1x96xf32>
    %88 = arith.divf %86, %87 : vector<1x96xf32>
    %89 = vector.extract_strided_slice %88 {offsets = [0, 0], sizes = [1, 32], strides = [1, 1]} : vector<1x96xf32> to vector<1x32xf32>
    %90 = vector.extract_strided_slice %88 {offsets = [0, 32], sizes = [1, 32], strides = [1, 1]} : vector<1x96xf32> to vector<1x32xf32>
    %91 = vector.extract_strided_slice %88 {offsets = [0, 64], sizes = [1, 32], strides = [1, 1]} : vector<1x96xf32> to vector<1x32xf32>
    %92 = vector.extract_strided_slice %80 {offsets = [0, 96], sizes = [1, 32], strides = [1, 1]} : vector<1x128xf32> to vector<1x32xf32>
    %93 = math.tanh %92 : vector<1x32xf32>
    %94 = arith.mulf %90, %57 : vector<1x32xf32>
    %95 = arith.mulf %89, %93 : vector<1x32xf32>
    %96 = arith.addf %94, %95 : vector<1x32xf32>
    %97 = math.tanh %96 : vector<1x32xf32>
    %98 = arith.mulf %91, %97 : vector<1x32xf32>
    %cst_28 = arith.constant dense<0.000000e+00> : vector<1x128xf32>
    %99 = tpu.matmul %98, %15, %cst_28 {dimension_numbers = #tpu.dot_dimension_numbers<[1], [0], [0], [1], [0, 0, 1, 1], [], []>} : vector<1x32xf32>, vector<32x128xf32>, vector<1x128xf32> -> vector<1x128xf32>
    %100 = arith.addf %99, %16 : vector<1x128xf32>
    %101 = vector.extract_strided_slice %82 {offsets = [0, 0], sizes = [1, 96], strides = [1, 1]} : vector<1x128xf32> to vector<1x96xf32>
    %102 = arith.negf %101 : vector<1x96xf32>
    %103 = math.exp %102 : vector<1x96xf32>
    %cst_29 = arith.constant 1.000000e+00 : f32
    %104 = vector.broadcast %cst_29 : f32 to vector<1x96xf32>
    %105 = arith.addf %104, %103 : vector<1x96xf32>
    %106 = arith.divf %104, %105 : vector<1x96xf32>
    %107 = vector.extract_strided_slice %106 {offsets = [0, 0], sizes = [1, 32], strides = [1, 1]} : vector<1x96xf32> to vector<1x32xf32>
    %108 = vector.extract_strided_slice %106 {offsets = [0, 32], sizes = [1, 32], strides = [1, 1]} : vector<1x96xf32> to vector<1x32xf32>
    %109 = vector.extract_strided_slice %106 {offsets = [0, 64], sizes = [1, 32], strides = [1, 1]} : vector<1x96xf32> to vector<1x32xf32>
    %110 = vector.extract_strided_slice %82 {offsets = [0, 96], sizes = [1, 32], strides = [1, 1]} : vector<1x128xf32> to vector<1x32xf32>
    %111 = math.tanh %110 : vector<1x32xf32>
    %112 = arith.mulf %108, %75 : vector<1x32xf32>
    %113 = arith.mulf %107, %111 : vector<1x32xf32>
    %114 = arith.addf %112, %113 : vector<1x32xf32>
    %115 = math.tanh %114 : vector<1x32xf32>
    %116 = arith.mulf %109, %115 : vector<1x32xf32>
    %117 = vector.extract_strided_slice %12 {offsets = [3, 0], sizes = [1, 128], strides = [1, 1]} : vector<8x128xf32> to vector<1x128xf32>
    %cst_30 = arith.constant dense<0.000000e+00> : vector<1x128xf32>
    %118 = tpu.matmul %98, %13, %cst_30 {dimension_numbers = #tpu.dot_dimension_numbers<[1], [0], [0], [1], [0, 0, 1, 1], [], []>} : vector<1x32xf32>, vector<32x128xf32>, vector<1x128xf32> -> vector<1x128xf32>
    %119 = arith.addf %117, %118 : vector<1x128xf32>
    %cst_31 = arith.constant dense<0.000000e+00> : vector<1x128xf32>
    %120 = tpu.matmul %116, %14, %cst_31 {dimension_numbers = #tpu.dot_dimension_numbers<[1], [0], [0], [1], [0, 0, 1, 1], [], []>} : vector<1x32xf32>, vector<32x128xf32>, vector<1x128xf32> -> vector<1x128xf32>
    %121 = arith.addf %100, %120 : vector<1x128xf32>
    %122 = vector.extract_strided_slice %119 {offsets = [0, 0], sizes = [1, 96], strides = [1, 1]} : vector<1x128xf32> to vector<1x96xf32>
    %123 = arith.negf %122 : vector<1x96xf32>
    %124 = math.exp %123 : vector<1x96xf32>
    %cst_32 = arith.constant 1.000000e+00 : f32
    %125 = vector.broadcast %cst_32 : f32 to vector<1x96xf32>
    %126 = arith.addf %125, %124 : vector<1x96xf32>
    %127 = arith.divf %125, %126 : vector<1x96xf32>
    %128 = vector.extract_strided_slice %127 {offsets = [0, 0], sizes = [1, 32], strides = [1, 1]} : vector<1x96xf32> to vector<1x32xf32>
    %129 = vector.extract_strided_slice %127 {offsets = [0, 32], sizes = [1, 32], strides = [1, 1]} : vector<1x96xf32> to vector<1x32xf32>
    %130 = vector.extract_strided_slice %127 {offsets = [0, 64], sizes = [1, 32], strides = [1, 1]} : vector<1x96xf32> to vector<1x32xf32>
    %131 = vector.extract_strided_slice %119 {offsets = [0, 96], sizes = [1, 32], strides = [1, 1]} : vector<1x128xf32> to vector<1x32xf32>
    %132 = math.tanh %131 : vector<1x32xf32>
    %133 = arith.mulf %129, %96 : vector<1x32xf32>
    %134 = arith.mulf %128, %132 : vector<1x32xf32>
    %135 = arith.addf %133, %134 : vector<1x32xf32>
    %136 = math.tanh %135 : vector<1x32xf32>
    %137 = arith.mulf %130, %136 : vector<1x32xf32>
    %cst_33 = arith.constant dense<0.000000e+00> : vector<1x128xf32>
    %138 = tpu.matmul %137, %15, %cst_33 {dimension_numbers = #tpu.dot_dimension_numbers<[1], [0], [0], [1], [0, 0, 1, 1], [], []>} : vector<1x32xf32>, vector<32x128xf32>, vector<1x128xf32> -> vector<1x128xf32>
    %139 = arith.addf %138, %16 : vector<1x128xf32>
    %140 = vector.extract_strided_slice %121 {offsets = [0, 0], sizes = [1, 96], strides = [1, 1]} : vector<1x128xf32> to vector<1x96xf32>
    %141 = arith.negf %140 : vector<1x96xf32>
    %142 = math.exp %141 : vector<1x96xf32>
    %cst_34 = arith.constant 1.000000e+00 : f32
    %143 = vector.broadcast %cst_34 : f32 to vector<1x96xf32>
    %144 = arith.addf %143, %142 : vector<1x96xf32>
    %145 = arith.divf %143, %144 : vector<1x96xf32>
    %146 = vector.extract_strided_slice %145 {offsets = [0, 0], sizes = [1, 32], strides = [1, 1]} : vector<1x96xf32> to vector<1x32xf32>
    %147 = vector.extract_strided_slice %145 {offsets = [0, 32], sizes = [1, 32], strides = [1, 1]} : vector<1x96xf32> to vector<1x32xf32>
    %148 = vector.extract_strided_slice %145 {offsets = [0, 64], sizes = [1, 32], strides = [1, 1]} : vector<1x96xf32> to vector<1x32xf32>
    %149 = vector.extract_strided_slice %121 {offsets = [0, 96], sizes = [1, 32], strides = [1, 1]} : vector<1x128xf32> to vector<1x32xf32>
    %150 = math.tanh %149 : vector<1x32xf32>
    %151 = arith.mulf %147, %114 : vector<1x32xf32>
    %152 = arith.mulf %146, %150 : vector<1x32xf32>
    %153 = arith.addf %151, %152 : vector<1x32xf32>
    %154 = math.tanh %153 : vector<1x32xf32>
    %155 = arith.mulf %148, %154 : vector<1x32xf32>
    %156 = vector.extract_strided_slice %12 {offsets = [4, 0], sizes = [1, 128], strides = [1, 1]} : vector<8x128xf32> to vector<1x128xf32>
    %cst_35 = arith.constant dense<0.000000e+00> : vector<1x128xf32>
    %157 = tpu.matmul %137, %13, %cst_35 {dimension_numbers = #tpu.dot_dimension_numbers<[1], [0], [0], [1], [0, 0, 1, 1], [], []>} : vector<1x32xf32>, vector<32x128xf32>, vector<1x128xf32> -> vector<1x128xf32>
    %158 = arith.addf %156, %157 : vector<1x128xf32>
    %cst_36 = arith.constant dense<0.000000e+00> : vector<1x128xf32>
    %159 = tpu.matmul %155, %14, %cst_36 {dimension_numbers = #tpu.dot_dimension_numbers<[1], [0], [0], [1], [0, 0, 1, 1], [], []>} : vector<1x32xf32>, vector<32x128xf32>, vector<1x128xf32> -> vector<1x128xf32>
    %160 = arith.addf %139, %159 : vector<1x128xf32>
    %161 = vector.extract_strided_slice %158 {offsets = [0, 0], sizes = [1, 96], strides = [1, 1]} : vector<1x128xf32> to vector<1x96xf32>
    %162 = arith.negf %161 : vector<1x96xf32>
    %163 = math.exp %162 : vector<1x96xf32>
    %cst_37 = arith.constant 1.000000e+00 : f32
    %164 = vector.broadcast %cst_37 : f32 to vector<1x96xf32>
    %165 = arith.addf %164, %163 : vector<1x96xf32>
    %166 = arith.divf %164, %165 : vector<1x96xf32>
    %167 = vector.extract_strided_slice %166 {offsets = [0, 0], sizes = [1, 32], strides = [1, 1]} : vector<1x96xf32> to vector<1x32xf32>
    %168 = vector.extract_strided_slice %166 {offsets = [0, 32], sizes = [1, 32], strides = [1, 1]} : vector<1x96xf32> to vector<1x32xf32>
    %169 = vector.extract_strided_slice %166 {offsets = [0, 64], sizes = [1, 32], strides = [1, 1]} : vector<1x96xf32> to vector<1x32xf32>
    %170 = vector.extract_strided_slice %158 {offsets = [0, 96], sizes = [1, 32], strides = [1, 1]} : vector<1x128xf32> to vector<1x32xf32>
    %171 = math.tanh %170 : vector<1x32xf32>
    %172 = arith.mulf %168, %135 : vector<1x32xf32>
    %173 = arith.mulf %167, %171 : vector<1x32xf32>
    %174 = arith.addf %172, %173 : vector<1x32xf32>
    %175 = math.tanh %174 : vector<1x32xf32>
    %176 = arith.mulf %169, %175 : vector<1x32xf32>
    %cst_38 = arith.constant dense<0.000000e+00> : vector<1x128xf32>
    %177 = tpu.matmul %176, %15, %cst_38 {dimension_numbers = #tpu.dot_dimension_numbers<[1], [0], [0], [1], [0, 0, 1, 1], [], []>} : vector<1x32xf32>, vector<32x128xf32>, vector<1x128xf32> -> vector<1x128xf32>
    %178 = arith.addf %177, %16 : vector<1x128xf32>
    %179 = vector.extract_strided_slice %160 {offsets = [0, 0], sizes = [1, 96], strides = [1, 1]} : vector<1x128xf32> to vector<1x96xf32>
    %180 = arith.negf %179 : vector<1x96xf32>
    %181 = math.exp %180 : vector<1x96xf32>
    %cst_39 = arith.constant 1.000000e+00 : f32
    %182 = vector.broadcast %cst_39 : f32 to vector<1x96xf32>
    %183 = arith.addf %182, %181 : vector<1x96xf32>
    %184 = arith.divf %182, %183 : vector<1x96xf32>
    %185 = vector.extract_strided_slice %184 {offsets = [0, 0], sizes = [1, 32], strides = [1, 1]} : vector<1x96xf32> to vector<1x32xf32>
    %186 = vector.extract_strided_slice %184 {offsets = [0, 32], sizes = [1, 32], strides = [1, 1]} : vector<1x96xf32> to vector<1x32xf32>
    %187 = vector.extract_strided_slice %184 {offsets = [0, 64], sizes = [1, 32], strides = [1, 1]} : vector<1x96xf32> to vector<1x32xf32>
    %188 = vector.extract_strided_slice %160 {offsets = [0, 96], sizes = [1, 32], strides = [1, 1]} : vector<1x128xf32> to vector<1x32xf32>
    %189 = math.tanh %188 : vector<1x32xf32>
    %190 = arith.mulf %186, %153 : vector<1x32xf32>
    %191 = arith.mulf %185, %189 : vector<1x32xf32>
    %192 = arith.addf %190, %191 : vector<1x32xf32>
    %193 = math.tanh %192 : vector<1x32xf32>
    %194 = arith.mulf %187, %193 : vector<1x32xf32>
    %195 = vector.extract_strided_slice %12 {offsets = [5, 0], sizes = [1, 128], strides = [1, 1]} : vector<8x128xf32> to vector<1x128xf32>
    %cst_40 = arith.constant dense<0.000000e+00> : vector<1x128xf32>
    %196 = tpu.matmul %176, %13, %cst_40 {dimension_numbers = #tpu.dot_dimension_numbers<[1], [0], [0], [1], [0, 0, 1, 1], [], []>} : vector<1x32xf32>, vector<32x128xf32>, vector<1x128xf32> -> vector<1x128xf32>
    %197 = arith.addf %195, %196 : vector<1x128xf32>
    %cst_41 = arith.constant dense<0.000000e+00> : vector<1x128xf32>
    %198 = tpu.matmul %194, %14, %cst_41 {dimension_numbers = #tpu.dot_dimension_numbers<[1], [0], [0], [1], [0, 0, 1, 1], [], []>} : vector<1x32xf32>, vector<32x128xf32>, vector<1x128xf32> -> vector<1x128xf32>
    %199 = arith.addf %178, %198 : vector<1x128xf32>
    %200 = vector.extract_strided_slice %197 {offsets = [0, 0], sizes = [1, 96], strides = [1, 1]} : vector<1x128xf32> to vector<1x96xf32>
    %201 = arith.negf %200 : vector<1x96xf32>
    %202 = math.exp %201 : vector<1x96xf32>
    %cst_42 = arith.constant 1.000000e+00 : f32
    %203 = vector.broadcast %cst_42 : f32 to vector<1x96xf32>
    %204 = arith.addf %203, %202 : vector<1x96xf32>
    %205 = arith.divf %203, %204 : vector<1x96xf32>
    %206 = vector.extract_strided_slice %205 {offsets = [0, 0], sizes = [1, 32], strides = [1, 1]} : vector<1x96xf32> to vector<1x32xf32>
    %207 = vector.extract_strided_slice %205 {offsets = [0, 32], sizes = [1, 32], strides = [1, 1]} : vector<1x96xf32> to vector<1x32xf32>
    %208 = vector.extract_strided_slice %205 {offsets = [0, 64], sizes = [1, 32], strides = [1, 1]} : vector<1x96xf32> to vector<1x32xf32>
    %209 = vector.extract_strided_slice %197 {offsets = [0, 96], sizes = [1, 32], strides = [1, 1]} : vector<1x128xf32> to vector<1x32xf32>
    %210 = math.tanh %209 : vector<1x32xf32>
    %211 = arith.mulf %207, %174 : vector<1x32xf32>
    %212 = arith.mulf %206, %210 : vector<1x32xf32>
    %213 = arith.addf %211, %212 : vector<1x32xf32>
    %214 = math.tanh %213 : vector<1x32xf32>
    %215 = arith.mulf %208, %214 : vector<1x32xf32>
    %cst_43 = arith.constant dense<0.000000e+00> : vector<1x128xf32>
    %216 = tpu.matmul %215, %15, %cst_43 {dimension_numbers = #tpu.dot_dimension_numbers<[1], [0], [0], [1], [0, 0, 1, 1], [], []>} : vector<1x32xf32>, vector<32x128xf32>, vector<1x128xf32> -> vector<1x128xf32>
    %217 = arith.addf %216, %16 : vector<1x128xf32>
    %218 = vector.extract_strided_slice %199 {offsets = [0, 0], sizes = [1, 96], strides = [1, 1]} : vector<1x128xf32> to vector<1x96xf32>
    %219 = arith.negf %218 : vector<1x96xf32>
    %220 = math.exp %219 : vector<1x96xf32>
    %cst_44 = arith.constant 1.000000e+00 : f32
    %221 = vector.broadcast %cst_44 : f32 to vector<1x96xf32>
    %222 = arith.addf %221, %220 : vector<1x96xf32>
    %223 = arith.divf %221, %222 : vector<1x96xf32>
    %224 = vector.extract_strided_slice %223 {offsets = [0, 0], sizes = [1, 32], strides = [1, 1]} : vector<1x96xf32> to vector<1x32xf32>
    %225 = vector.extract_strided_slice %223 {offsets = [0, 32], sizes = [1, 32], strides = [1, 1]} : vector<1x96xf32> to vector<1x32xf32>
    %226 = vector.extract_strided_slice %223 {offsets = [0, 64], sizes = [1, 32], strides = [1, 1]} : vector<1x96xf32> to vector<1x32xf32>
    %227 = vector.extract_strided_slice %199 {offsets = [0, 96], sizes = [1, 32], strides = [1, 1]} : vector<1x128xf32> to vector<1x32xf32>
    %228 = math.tanh %227 : vector<1x32xf32>
    %229 = arith.mulf %225, %192 : vector<1x32xf32>
    %230 = arith.mulf %224, %228 : vector<1x32xf32>
    %231 = arith.addf %229, %230 : vector<1x32xf32>
    %232 = math.tanh %231 : vector<1x32xf32>
    %233 = arith.mulf %226, %232 : vector<1x32xf32>
    %234 = vector.extract_strided_slice %12 {offsets = [6, 0], sizes = [1, 128], strides = [1, 1]} : vector<8x128xf32> to vector<1x128xf32>
    %cst_45 = arith.constant dense<0.000000e+00> : vector<1x128xf32>
    %235 = tpu.matmul %215, %13, %cst_45 {dimension_numbers = #tpu.dot_dimension_numbers<[1], [0], [0], [1], [0, 0, 1, 1], [], []>} : vector<1x32xf32>, vector<32x128xf32>, vector<1x128xf32> -> vector<1x128xf32>
    %236 = arith.addf %234, %235 : vector<1x128xf32>
    %cst_46 = arith.constant dense<0.000000e+00> : vector<1x128xf32>
    %237 = tpu.matmul %233, %14, %cst_46 {dimension_numbers = #tpu.dot_dimension_numbers<[1], [0], [0], [1], [0, 0, 1, 1], [], []>} : vector<1x32xf32>, vector<32x128xf32>, vector<1x128xf32> -> vector<1x128xf32>
    %238 = arith.addf %217, %237 : vector<1x128xf32>
    %239 = vector.extract_strided_slice %236 {offsets = [0, 0], sizes = [1, 96], strides = [1, 1]} : vector<1x128xf32> to vector<1x96xf32>
    %240 = arith.negf %239 : vector<1x96xf32>
    %241 = math.exp %240 : vector<1x96xf32>
    %cst_47 = arith.constant 1.000000e+00 : f32
    %242 = vector.broadcast %cst_47 : f32 to vector<1x96xf32>
    %243 = arith.addf %242, %241 : vector<1x96xf32>
    %244 = arith.divf %242, %243 : vector<1x96xf32>
    %245 = vector.extract_strided_slice %244 {offsets = [0, 0], sizes = [1, 32], strides = [1, 1]} : vector<1x96xf32> to vector<1x32xf32>
    %246 = vector.extract_strided_slice %244 {offsets = [0, 32], sizes = [1, 32], strides = [1, 1]} : vector<1x96xf32> to vector<1x32xf32>
    %247 = vector.extract_strided_slice %244 {offsets = [0, 64], sizes = [1, 32], strides = [1, 1]} : vector<1x96xf32> to vector<1x32xf32>
    %248 = vector.extract_strided_slice %236 {offsets = [0, 96], sizes = [1, 32], strides = [1, 1]} : vector<1x128xf32> to vector<1x32xf32>
    %249 = math.tanh %248 : vector<1x32xf32>
    %250 = arith.mulf %246, %213 : vector<1x32xf32>
    %251 = arith.mulf %245, %249 : vector<1x32xf32>
    %252 = arith.addf %250, %251 : vector<1x32xf32>
    %253 = math.tanh %252 : vector<1x32xf32>
    %254 = arith.mulf %247, %253 : vector<1x32xf32>
    %cst_48 = arith.constant dense<0.000000e+00> : vector<1x128xf32>
    %255 = tpu.matmul %254, %15, %cst_48 {dimension_numbers = #tpu.dot_dimension_numbers<[1], [0], [0], [1], [0, 0, 1, 1], [], []>} : vector<1x32xf32>, vector<32x128xf32>, vector<1x128xf32> -> vector<1x128xf32>
    %256 = arith.addf %255, %16 : vector<1x128xf32>
    %257 = vector.extract_strided_slice %238 {offsets = [0, 0], sizes = [1, 96], strides = [1, 1]} : vector<1x128xf32> to vector<1x96xf32>
    %258 = arith.negf %257 : vector<1x96xf32>
    %259 = math.exp %258 : vector<1x96xf32>
    %cst_49 = arith.constant 1.000000e+00 : f32
    %260 = vector.broadcast %cst_49 : f32 to vector<1x96xf32>
    %261 = arith.addf %260, %259 : vector<1x96xf32>
    %262 = arith.divf %260, %261 : vector<1x96xf32>
    %263 = vector.extract_strided_slice %262 {offsets = [0, 0], sizes = [1, 32], strides = [1, 1]} : vector<1x96xf32> to vector<1x32xf32>
    %264 = vector.extract_strided_slice %262 {offsets = [0, 32], sizes = [1, 32], strides = [1, 1]} : vector<1x96xf32> to vector<1x32xf32>
    %265 = vector.extract_strided_slice %262 {offsets = [0, 64], sizes = [1, 32], strides = [1, 1]} : vector<1x96xf32> to vector<1x32xf32>
    %266 = vector.extract_strided_slice %238 {offsets = [0, 96], sizes = [1, 32], strides = [1, 1]} : vector<1x128xf32> to vector<1x32xf32>
    %267 = math.tanh %266 : vector<1x32xf32>
    %268 = arith.mulf %264, %231 : vector<1x32xf32>
    %269 = arith.mulf %263, %267 : vector<1x32xf32>
    %270 = arith.addf %268, %269 : vector<1x32xf32>
    %271 = math.tanh %270 : vector<1x32xf32>
    %272 = arith.mulf %265, %271 : vector<1x32xf32>
    %273 = vector.extract_strided_slice %12 {offsets = [7, 0], sizes = [1, 128], strides = [1, 1]} : vector<8x128xf32> to vector<1x128xf32>
    %cst_50 = arith.constant dense<0.000000e+00> : vector<1x128xf32>
    %274 = tpu.matmul %254, %13, %cst_50 {dimension_numbers = #tpu.dot_dimension_numbers<[1], [0], [0], [1], [0, 0, 1, 1], [], []>} : vector<1x32xf32>, vector<32x128xf32>, vector<1x128xf32> -> vector<1x128xf32>
    %275 = arith.addf %273, %274 : vector<1x128xf32>
    %cst_51 = arith.constant dense<0.000000e+00> : vector<1x128xf32>
    %276 = tpu.matmul %272, %14, %cst_51 {dimension_numbers = #tpu.dot_dimension_numbers<[1], [0], [0], [1], [0, 0, 1, 1], [], []>} : vector<1x32xf32>, vector<32x128xf32>, vector<1x128xf32> -> vector<1x128xf32>
    %277 = arith.addf %256, %276 : vector<1x128xf32>
    %278 = vector.extract_strided_slice %275 {offsets = [0, 0], sizes = [1, 96], strides = [1, 1]} : vector<1x128xf32> to vector<1x96xf32>
    %279 = arith.negf %278 : vector<1x96xf32>
    %280 = math.exp %279 : vector<1x96xf32>
    %cst_52 = arith.constant 1.000000e+00 : f32
    %281 = vector.broadcast %cst_52 : f32 to vector<1x96xf32>
    %282 = arith.addf %281, %280 : vector<1x96xf32>
    %283 = arith.divf %281, %282 : vector<1x96xf32>
    %284 = vector.extract_strided_slice %283 {offsets = [0, 0], sizes = [1, 32], strides = [1, 1]} : vector<1x96xf32> to vector<1x32xf32>
    %285 = vector.extract_strided_slice %283 {offsets = [0, 32], sizes = [1, 32], strides = [1, 1]} : vector<1x96xf32> to vector<1x32xf32>
    %286 = vector.extract_strided_slice %283 {offsets = [0, 64], sizes = [1, 32], strides = [1, 1]} : vector<1x96xf32> to vector<1x32xf32>
    %287 = vector.extract_strided_slice %275 {offsets = [0, 96], sizes = [1, 32], strides = [1, 1]} : vector<1x128xf32> to vector<1x32xf32>
    %288 = math.tanh %287 : vector<1x32xf32>
    %289 = arith.mulf %285, %252 : vector<1x32xf32>
    %290 = arith.mulf %284, %288 : vector<1x32xf32>
    %291 = arith.addf %289, %290 : vector<1x32xf32>
    %292 = math.tanh %291 : vector<1x32xf32>
    %293 = arith.mulf %286, %292 : vector<1x32xf32>
    %cst_53 = arith.constant dense<0.000000e+00> : vector<1x128xf32>
    %294 = tpu.matmul %293, %15, %cst_53 {dimension_numbers = #tpu.dot_dimension_numbers<[1], [0], [0], [1], [0, 0, 1, 1], [], []>} : vector<1x32xf32>, vector<32x128xf32>, vector<1x128xf32> -> vector<1x128xf32>
    %295 = arith.addf %294, %16 : vector<1x128xf32>
    %296 = vector.extract_strided_slice %277 {offsets = [0, 0], sizes = [1, 96], strides = [1, 1]} : vector<1x128xf32> to vector<1x96xf32>
    %297 = arith.negf %296 : vector<1x96xf32>
    %298 = math.exp %297 : vector<1x96xf32>
    %cst_54 = arith.constant 1.000000e+00 : f32
    %299 = vector.broadcast %cst_54 : f32 to vector<1x96xf32>
    %300 = arith.addf %299, %298 : vector<1x96xf32>
    %301 = arith.divf %299, %300 : vector<1x96xf32>
    %302 = vector.extract_strided_slice %301 {offsets = [0, 0], sizes = [1, 32], strides = [1, 1]} : vector<1x96xf32> to vector<1x32xf32>
    %303 = vector.extract_strided_slice %301 {offsets = [0, 32], sizes = [1, 32], strides = [1, 1]} : vector<1x96xf32> to vector<1x32xf32>
    %304 = vector.extract_strided_slice %301 {offsets = [0, 64], sizes = [1, 32], strides = [1, 1]} : vector<1x96xf32> to vector<1x32xf32>
    %305 = vector.extract_strided_slice %277 {offsets = [0, 96], sizes = [1, 32], strides = [1, 1]} : vector<1x128xf32> to vector<1x32xf32>
    %306 = math.tanh %305 : vector<1x32xf32>
    %307 = arith.mulf %303, %270 : vector<1x32xf32>
    %308 = arith.mulf %302, %306 : vector<1x32xf32>
    %309 = arith.addf %307, %308 : vector<1x32xf32>
    %310 = math.tanh %309 : vector<1x32xf32>
    %311 = arith.mulf %304, %310 : vector<1x32xf32>
    %cst_55 = arith.constant dense<0.000000e+00> : vector<1x128xf32>
    %312 = tpu.matmul %311, %14, %cst_55 {dimension_numbers = #tpu.dot_dimension_numbers<[1], [0], [0], [1], [0, 0, 1, 1], [], []>} : vector<1x32xf32>, vector<32x128xf32>, vector<1x128xf32> -> vector<1x128xf32>
    %313 = arith.addf %295, %312 : vector<1x128xf32>
    %314 = vector.extract_strided_slice %313 {offsets = [0, 0], sizes = [1, 96], strides = [1, 1]} : vector<1x128xf32> to vector<1x96xf32>
    %315 = arith.negf %314 : vector<1x96xf32>
    %316 = math.exp %315 : vector<1x96xf32>
    %cst_56 = arith.constant 1.000000e+00 : f32
    %317 = vector.broadcast %cst_56 : f32 to vector<1x96xf32>
    %318 = arith.addf %317, %316 : vector<1x96xf32>
    %319 = arith.divf %317, %318 : vector<1x96xf32>
    %320 = vector.extract_strided_slice %319 {offsets = [0, 0], sizes = [1, 32], strides = [1, 1]} : vector<1x96xf32> to vector<1x32xf32>
    %321 = vector.extract_strided_slice %319 {offsets = [0, 32], sizes = [1, 32], strides = [1, 1]} : vector<1x96xf32> to vector<1x32xf32>
    %322 = vector.extract_strided_slice %319 {offsets = [0, 64], sizes = [1, 32], strides = [1, 1]} : vector<1x96xf32> to vector<1x32xf32>
    %323 = vector.extract_strided_slice %313 {offsets = [0, 96], sizes = [1, 32], strides = [1, 1]} : vector<1x128xf32> to vector<1x32xf32>
    %324 = math.tanh %323 : vector<1x32xf32>
    %325 = arith.mulf %321, %309 : vector<1x32xf32>
    %326 = arith.mulf %320, %324 : vector<1x32xf32>
    %327 = arith.addf %325, %326 : vector<1x32xf32>
    %328 = math.tanh %327 : vector<1x32xf32>
    %329 = arith.mulf %322, %328 : vector<1x32xf32>
    %330 = tpu.concatenate %77, %116, %155, %194, %233, %272, %311, %329 in 0 : vector<1x32xf32>, vector<1x32xf32>, vector<1x32xf32>, vector<1x32xf32>, vector<1x32xf32>, vector<1x32xf32>, vector<1x32xf32>, vector<1x32xf32> -> vector<8x32xf32>
    %c0_57 = arith.constant 0 : index
    %c0_58 = arith.constant 0 : index
    %331 = vector.load %arg8[%c0_57, %c0_58] : memref<32x128xf32, #tpu.memory_space<vmem>>, vector<32x128xf32>
    %cst_59 = arith.constant dense<0.000000e+00> : vector<8x128xf32>
    %332 = tpu.matmul %330, %331, %cst_59 {dimension_numbers = #tpu.dot_dimension_numbers<[1], [0], [0], [1], [0, 0, 1, 1], [], []>} : vector<8x32xf32>, vector<32x128xf32>, vector<8x128xf32> -> vector<8x128xf32>
    %c0_60 = arith.constant 0 : index
    %c0_61 = arith.constant 0 : index
    %333 = vector.load %arg9[%c0_60, %c0_61] : memref<1x128xf32, #tpu.memory_space<vmem>>, vector<1x128xf32>
    %334 = vector.broadcast %333 : vector<1x128xf32> to vector<8x128xf32>
    %335 = arith.addf %332, %334 : vector<8x128xf32>
    %c0_62 = arith.constant 0 : index
    %c0_63 = arith.constant 0 : index
    %336 = vector.load %arg10[%c0_62, %c0_63] : memref<8x128xf32, #tpu.memory_space<vmem>>, vector<8x128xf32>
    tpu.vector_store %arg10[%c0_62, %c0_63], %335 {strides = array<i32>} : memref<8x128xf32, #tpu.memory_space<vmem>>, vector<8x128xf32>,
    return
  }
}

</mosaic_0001>

<llo_original>
// kernel: lstm_network_forward.1
$region0: #{lstm_network_forward.1}
  #allocation0 [shape = 'u32[]', space=smem, size = 0x4, offset = 0x4, fixed_abs, tag = 'smem constant byte address 0x4 - core index']
  #allocation1 [shape = 'u32[72,128]{1,0:T(1,128)}', space=vmem, size = 0x9000, scoped, tag = 'internal scratch']
  %s0 = inlined_call_operand.vmem [shape: s32[8,1], index: 0, kind: input, shape index: {}]
  %s1 = inlined_call_operand.vmem [shape: f32[32,16], index: 1, kind: input, shape index: {}]
  %s2 = inlined_call_operand.hbm [shape: f32[16,128], index: 2, kind: input, shape index: {}]
  %s3 = inlined_call_operand.vmem [shape: f32[32,128], index: 3, kind: input, shape index: {}]
  %s4 = inlined_call_operand.hbm [shape: f32[1,128], index: 4, kind: input, shape index: {}]
  %s5 = inlined_call_operand.vmem [shape: f32[32,128], index: 5, kind: input, shape index: {}]
  %s6 = inlined_call_operand.hbm [shape: f32[32,128], index: 6, kind: input, shape index: {}]
  %s7 = inlined_call_operand.hbm [shape: f32[1,128], index: 7, kind: input, shape index: {}]
  %s8 = inlined_call_operand.hbm [shape: f32[32,128], index: 8, kind: input, shape index: {}]
  %s9 = inlined_call_operand.hbm [shape: f32[1,128], index: 9, kind: input, shape index: {}]
  %s10 = inlined_call_operand.hbm [shape: f32[8,128], index: 10, kind: output, shape index: {}]
  %s11 = sld [smem:[#allocation0]]
  $region74: #{lstm_network_forward.1} parent=0
    _
  %s13 = ssub.s32 1, %s11
  %s14 = scalar_select 0, %s13, %s11
  $region1: #{lstm_network_forward.1} parent=0
    #allocation2 [shape = 'u8[8192]{0}', space=vmem, size = 0x2000, scoped, tag = 'input window, operand 2, single buffered']
    #allocation3 [shape = 's32[1]{0}', space=sflag, size = 0x4, scoped, tag = 'scoped memory for lstm_network_forward.1']
    #allocation4 [shape = 's32[1]{0}', space=sflag, size = 0x4, scoped, tag = 'scoped memory for lstm_network_forward.1']
    #allocation5 [shape = 'u8[512]{0}', space=vmem, size = 0x400, scoped, tag = 'input window, operand 4, single buffered']
    #allocation6 [shape = 's32[1]{0}', space=sflag, size = 0x4, scoped, tag = 'scoped memory for lstm_network_forward.1']
    #allocation7 [shape = 'u8[16384]{0}', space=vmem, size = 0x4000, scoped, tag = 'input window, operand 6, single buffered']
    #allocation8 [shape = 'u8[512]{0}', space=vmem, size = 0x400, scoped, tag = 'input window, operand 7, single buffered']
    #allocation9 [shape = 's32[1]{0}', space=sflag, size = 0x4, scoped, tag = 'scoped memory for lstm_network_forward.1']
    #allocation10 [shape = 'u8[16384]{0}', space=vmem, size = 0x4000, scoped, tag = 'input window, operand 8, single buffered']
    #allocation11 [shape = 'u8[512]{0}', space=vmem, size = 0x400, scoped, tag = 'input window, operand 9, single buffered']
    #allocation12 [shape = 's32[1]{0}', space=sflag, size = 0x4, scoped, tag = 'scoped memory for lstm_network_forward.1']
    #allocation13 [shape = 'u8[4096]{0}', space=vmem, size = 0x1000, scoped, tag = 'output window, operand 0, single buffered']
    %15 = vsyncpa [#allocation3], 0
    %16 = vsyncpa [#allocation6], 0
    %17 = vsyncpa [#allocation9], 0
    %18 = vsyncpa [#allocation12], 0
    %19 = vsyncpa [#allocation4], 0
    // Predicated region
    $region2: #{lstm_network_forward.1} parent=1 // pred_check
      _
    $region3: #{lstm_network_forward.1} parent=1 // pred_check_branch
      %21 = sbr.rel (0) target = $region5
    $region4: #{lstm_network_forward.1} parent=1 // pred_region
      _
    $region5: #{lstm_network_forward.1} parent=1 // pred_fallthru
      _
    // Predicated region
    $region6: #{lstm_network_forward.1} parent=1 // pred_check
      _
    $region7: #{lstm_network_forward.1} parent=1 // pred_check_branch
      %23 = sbr.rel (0) target = $region9
    $region8: #{lstm_network_forward.1} parent=1 // pred_region
      _
    $region9: #{lstm_network_forward.1} parent=1 // pred_fallthru
      _
    // Predicated region
    $region10: #{lstm_network_forward.1} parent=1 // pred_check
      _
    $region11: #{lstm_network_forward.1} parent=1 // pred_check_branch
      %25 = sbr.rel (0) target = $region13
    $region12: #{lstm_network_forward.1} parent=1 // pred_region
      %27 = vsyncadd [#allocation3], 0
      %s28 = sshll.u32 %s2, 4
      %s29 = int_to_ptr.hbm [resolvable:$true] %s28
      %s30 = sshll.u32 [#allocation2], 4
      %s31 = int_to_ptr.vmem [resolvable:$true] %s30
      %36 = dma.hbm_to_vmem [thread:$0]  %s29, 256, %s31, [#allocation3], 128, 128, 8
    $region13: #{lstm_network_forward.1} parent=1 // pred_fallthru
      _
    // Predicated region
    $region14: #{lstm_network_forward.1} parent=1 // pred_check
      _
    $region15: #{lstm_network_forward.1} parent=1 // pred_check_branch
      %38 = sbr.rel (0) target = $region17
    $region16: #{lstm_network_forward.1} parent=1 // pred_region
      _
    $region17: #{lstm_network_forward.1} parent=1 // pred_fallthru
      _
    // Predicated region
    $region18: #{lstm_network_forward.1} parent=1 // pred_check
      _
    $region19: #{lstm_network_forward.1} parent=1 // pred_check_branch
      %40 = sbr.rel (0) target = $region21
    $region20: #{lstm_network_forward.1} parent=1 // pred_region
      %42 = vsyncadd [#allocation6], 0
      %s44 = sshll.u32 %s4, 4
      %s45 = int_to_ptr.hbm [resolvable:$true] %s44
      %s46 = sshll.u32 [#allocation5], 4
      %s47 = int_to_ptr.vmem [resolvable:$true] %s46
      %49 = dma.hbm_to_vmem [thread:$0]  %s45, 16, %s47, [#allocation6]
    $region21: #{lstm_network_forward.1} parent=1 // pred_fallthru
      _
    // Predicated region
    $region22: #{lstm_network_forward.1} parent=1 // pred_check
      _
    $region23: #{lstm_network_forward.1} parent=1 // pred_check_branch
      %51 = sbr.rel (0) target = $region25
    $region24: #{lstm_network_forward.1} parent=1 // pred_region
      _
    $region25: #{lstm_network_forward.1} parent=1 // pred_fallthru
      _
    // Predicated region
    $region26: #{lstm_network_forward.1} parent=1 // pred_check
      _
    $region27: #{lstm_network_forward.1} parent=1 // pred_check_branch
      %53 = sbr.rel (0) target = $region29
    $region28: #{lstm_network_forward.1} parent=1 // pred_region
      %55 = vsyncadd [#allocation6], 0
      %s56 = sshll.u32 %s6, 4
      %s57 = int_to_ptr.hbm [resolvable:$true] %s56
      %s58 = sshll.u32 [#allocation7], 4
      %s59 = int_to_ptr.vmem [resolvable:$true] %s58
      %64 = dma.hbm_to_vmem [thread:$0]  %s57, 512, %s59, [#allocation6], 128, 128, 8
    $region29: #{lstm_network_forward.1} parent=1 // pred_fallthru
      _
    // Predicated region
    $region30: #{lstm_network_forward.1} parent=1 // pred_check
      _
    $region31: #{lstm_network_forward.1} parent=1 // pred_check_branch
      %66 = sbr.rel (0) target = $region33
    $region32: #{lstm_network_forward.1} parent=1 // pred_region
      %68 = vsyncadd [#allocation9], 0
      %s70 = sshll.u32 %s7, 4
      %s71 = int_to_ptr.hbm [resolvable:$true] %s70
      %s72 = sshll.u32 [#allocation8], 4
      %s73 = int_to_ptr.vmem [resolvable:$true] %s72
      %75 = dma.hbm_to_vmem [thread:$0]  %s71, 16, %s73, [#allocation9]
    $region33: #{lstm_network_forward.1} parent=1 // pred_fallthru
      _
    // Predicated region
    $region34: #{lstm_network_forward.1} parent=1 // pred_check
      _
    $region35: #{lstm_network_forward.1} parent=1 // pred_check_branch
      %77 = sbr.rel (0) target = $region37
    $region36: #{lstm_network_forward.1} parent=1 // pred_region
      %79 = vsyncadd [#allocation9], 0
      %s80 = sshll.u32 %s8, 4
      %s81 = int_to_ptr.hbm [resolvable:$true] %s80
      %s82 = sshll.u32 [#allocation10], 4
      %s83 = int_to_ptr.vmem [resolvable:$true] %s82
      %88 = dma.hbm_to_vmem [thread:$0]  %s81, 512, %s83, [#allocation9], 128, 128, 8
    $region37: #{lstm_network_forward.1} parent=1 // pred_fallthru
      _
    // Predicated region
    $region38: #{lstm_network_forward.1} parent=1 // pred_check
      _
    $region39: #{lstm_network_forward.1} parent=1 // pred_check_branch
      %90 = sbr.rel (0) target = $region41
    $region40: #{lstm_network_forward.1} parent=1 // pred_region
      %92 = vsyncadd [#allocation12], 0
      %s94 = sshll.u32 %s9, 4
      %s95 = int_to_ptr.hbm [resolvable:$true] %s94
      %s96 = sshll.u32 [#allocation11], 4
      %s97 = int_to_ptr.vmem [resolvable:$true] %s96
      %99 = dma.hbm_to_vmem [thread:$0]  %s95, 16, %s97, [#allocation12]
    $region41: #{lstm_network_forward.1} parent=1 // pred_fallthru
      _
    // Predicated region
    $region42: #{lstm_network_forward.1} parent=1 // pred_check
      _
    $region43: #{lstm_network_forward.1} parent=1 // pred_check_branch
      %101 = sbr.rel (0) target = $region45
    $region44: #{lstm_network_forward.1} parent=1 // pred_region
      %103 = dma.done [#allocation3], 256
    $region45: #{lstm_network_forward.1} parent=1 // pred_fallthru
      _
    // Predicated region
    $region46: #{lstm_network_forward.1} parent=1 // pred_check
      _
    $region47: #{lstm_network_forward.1} parent=1 // pred_check_branch
      %105 = sbr.rel (0) target = $region49
    $region48: #{lstm_network_forward.1} parent=1 // pred_region
      %107 = dma.done [#allocation6], 16
    $region49: #{lstm_network_forward.1} parent=1 // pred_fallthru
      _
    // Predicated region
    $region50: #{lstm_network_forward.1} parent=1 // pred_check
      _
    $region51: #{lstm_network_forward.1} parent=1 // pred_check_branch
      %109 = sbr.rel (0) target = $region53
    $region52: #{lstm_network_forward.1} parent=1 // pred_region
      %111 = dma.done [#allocation6], 512
    $region53: #{lstm_network_forward.1} parent=1 // pred_fallthru
      _
    // Predicated region
    $region54: #{lstm_network_forward.1} parent=1 // pred_check
      _
    $region55: #{lstm_network_forward.1} parent=1 // pred_check_branch
      %113 = sbr.rel (0) target = $region57
    $region56: #{lstm_network_forward.1} parent=1 // pred_region
      %115 = dma.done [#allocation9], 16
    $region57: #{lstm_network_forward.1} parent=1 // pred_fallthru
      _
    // Predicated region
    $region58: #{lstm_network_forward.1} parent=1 // pred_check
      _
    $region59: #{lstm_network_forward.1} parent=1 // pred_check_branch
      %117 = sbr.rel (0) target = $region61
    $region60: #{lstm_network_forward.1} parent=1 // pred_region
      %119 = dma.done [#allocation9], 512
    $region61: #{lstm_network_forward.1} parent=1 // pred_fallthru
      _
    // Predicated region
    $region62: #{lstm_network_forward.1} parent=1 // pred_check
      _
    $region63: #{lstm_network_forward.1} parent=1 // pred_check_branch
      %121 = sbr.rel (0) target = $region65
    $region64: #{lstm_network_forward.1} parent=1 // pred_region
      %123 = dma.done [#allocation12], 16
    $region65: #{lstm_network_forward.1} parent=1 // pred_fallthru
      _
    %v124 = vld [vmem:[%s0] sm:$0xff]
    %v125 = vlaneseq
    %v126 = vand.u32 %v125, 127
    %127 = vset.pattern.permute.xlu0 0
    %128 = vperm.xlu0 %127, %v124
    %v129 = vpop.permute.xlu0 %128
    %vm130 = vcmp.eq.s32.totalorder %v126, %v129
    %v131 = vsel %vm130, 1, 0
    %v132 = vcvt.s32.f32 %v131
    %v133 = vld [vmem:[%s1] sm:$0xff]
    %v134 = vld [vmem:[%s1 + $0x8] sm:$0xff]
    %v135 = vld [vmem:[%s1 + $0x10] sm:$0xff]
    %v136 = vld [vmem:[%s1 + $0x18] sm:$0xff]
    %vm137 = vcmask 261120
    %v139 = vsel %vm137, %v132, 0
    %141 = vmatpush.msra.mxu0 0.0
    %142 = vmatpush.msra.mxu0 0.0
    %143 = vmatpush.msra.mxu0 0.0
    %144 = vmatpush.msra.mxu0 0.0
    %145 = vmatpush.msra.mxu0 0.0
    %146 = vmatpush.msra.mxu0 0.0
    %147 = vmatpush.msra.mxu0 0.0
    %148 = vmatpush.msra.mxu0 0.0
    %149 = vmatpush.msra.mxu0 0.0
    %150 = vmatpush.msra.mxu0 0.0
    %151 = vmatpush.msra.mxu0 0.0
    %152 = vmatpush.msra.mxu0 0.0
    %153 = vmatpush.msra.mxu0 %v136
    %154 = vmatpush.msra.mxu0 %v135
    %155 = vmatpush.msra.mxu0 %v134
    %156 = vmatpush.msra.mxu0 %v133
    %157 = vmatmul.f32.gmra.mxu0 %v139
    %v158 = vpop.f32.mrf.mxu0
    %v159 = vadd.f32 0.0, %v158
    %160 = vdwg.mxu0
    %v161 = vld [vmem:[#allocation2] sm:$0xff]
    %v162 = vld [vmem:[#allocation2 + $0x8] sm:$0xff]
    %v163 = vld [vmem:[#allocation5] sm:$0x1]
    %v165 = vperm.slane %v163, 0
    %vm167 = vcmask 130048
    %v169 = vsel %vm167, %v159, 0
    %171 = vmatpush.msra.mxu0 0.0
    %172 = vmatpush.msra.mxu0 0.0
    %173 = vmatpush.msra.mxu0 0.0
    %174 = vmatpush.msra.mxu0 0.0
    %175 = vmatpush.msra.mxu0 0.0
    %176 = vmatpush.msra.mxu0 0.0
    %177 = vmatpush.msra.mxu0 0.0
    %178 = vmatpush.msra.mxu0 0.0
    %179 = vmatpush.msra.mxu0 0.0
    %180 = vmatpush.msra.mxu0 0.0
    %181 = vmatpush.msra.mxu0 0.0
    %182 = vmatpush.msra.mxu0 0.0
    %183 = vmatpush.msra.mxu0 0.0
    %184 = vmatpush.msra.mxu0 0.0
    %185 = vmatpush.msra.mxu0 %v162
    %186 = vmatpush.msra.mxu0 %v161
    %187 = vmatmul.f32.gmra.mxu0 %v169
    %v188 = vpop.f32.mrf.mxu0
    %v189 = vadd.f32 %v165, %v188
    %190 = vdwg.mxu0
    %v191 = vld [vmem:[%s3] sm:$0xff]
    %v192 = vld [vmem:[%s3 + $0x8] sm:$0xff]
    %v193 = vld [vmem:[%s3 + $0x10] sm:$0xff]
    %v194 = vld [vmem:[%s3 + $0x18] sm:$0xff]
    %v195 = vld [vmem:[#allocation7] sm:$0xff]
    %v196 = vld [vmem:[#allocation7 + $0x8] sm:$0xff]
    %v197 = vld [vmem:[#allocation7 + $0x10] sm:$0xff]
    %v198 = vld [vmem:[#allocation7 + $0x18] sm:$0xff]
    %v199 = vld [vmem:[%s5] sm:$0xff]
    %v200 = vld [vmem:[%s5 + $0x8] sm:$0xff]
    %v201 = vld [vmem:[%s5 + $0x10] sm:$0xff]
    %v202 = vld [vmem:[%s5 + $0x18] sm:$0xff]
    %v203 = vld [vmem:[#allocation8] sm:$0x1]
    %v205 = vsel %vm137, 0.0, 0
    %207 = vmatpush.msra.mxu0 0.0
    %208 = vmatpush.msra.mxu0 0.0
    %209 = vmatpush.msra.mxu0 0.0
    %210 = vmatpush.msra.mxu0 0.0
    %211 = vmatpush.msra.mxu0 0.0
    %212 = vmatpush.msra.mxu0 0.0
    %213 = vmatpush.msra.mxu0 0.0
    %214 = vmatpush.msra.mxu0 0.0
    %215 = vmatpush.msra.mxu0 0.0
    %216 = vmatpush.msra.mxu0 0.0
    %217 = vmatpush.msra.mxu0 0.0
    %218 = vmatpush.msra.mxu0 0.0
    %219 = vmatpush.msra.mxu0 %v194
    %220 = vmatpush.msra.mxu0 %v193
    %221 = vmatpush.msra.mxu0 %v192
    %222 = vmatpush.msra.mxu0 %v191
    %223 = vmatmul.f32.gmra.mxu0 %v205
    %v224 = vpop.f32.mrf.mxu0
    %v225 = vadd.f32 0.0, %v224
    %226 = vdwg.mxu0
    %v227 = vadd.f32 %v189, %v225
    %v228 = vxor.u32 %v227, 2147483648
    %v229 = vmul.f32 %v228, 1.442695
    %v230 = vpow.pop %v229
    %v231 = vadd.f32 %v230, 1.0
    %v232 = vrcp.pop %v231
    %v233 = vmul.f32 %v231, %v232
    %v234 = vsub.f32 1.0, %v233
    %v235 = vmul.f32 %v232, %v234
    %v236 = vadd.f32 %v232, %v235
    %vm237 = vweird.f32 %v231
    %vm238 = vweird.f32 %v232
    %vm239 = vmor %vm237, %vm238
    %v240 = vsel %vm239, %v232, %v236
    %v241 = vand.u32 2147483647, %v231
    %vm242 = vcmp.eq.f32.partialorder %v241, 8.507059e+37
    %v243 = vand.u32 %v231, 2147483648
    %v244 = vor.u32 1.1754944e-38, %v243
    %v245 = vsel %vm242, %v244, %v240
    %v246 = vmul.f32 1.0, %v245
    %v247 = vtanh.pop %v227
    %v248 = vmul.f32 %v246, 0.0
    %250 = vrot.lane.b32.xlu0 %v247, 32
    %v251 = vpop.permute.xlu0 %250
    %v253 = vmul.f32 %v246, %v251
    %255 = vrot.lane.b32.xlu0 %v253, 32
    %v256 = vpop.permute.xlu0 %255
    %v258 = vadd.f32 %v248, %v256
    %v259 = vtanh.pop %v258
    %261 = vrot.lane.b32.xlu0 %v259, 32
    %v262 = vpop.permute.xlu0 %261
    %v264 = vmul.f32 %v246, %v262
    %266 = vrot.lane.b32.xlu0 %v264, 64
    %v267 = vpop.permute.xlu0 %266
    %v268 = vsel %vm137, %v267, 0
    %270 = vmatpush.msra.mxu0 0.0
    %271 = vmatpush.msra.mxu0 0.0
    %272 = vmatpush.msra.mxu0 0.0
    %273 = vmatpush.msra.mxu0 0.0
    %274 = vmatpush.msra.mxu0 0.0
    %275 = vmatpush.msra.mxu0 0.0
    %276 = vmatpush.msra.mxu0 0.0
    %277 = vmatpush.msra.mxu0 0.0
    %278 = vmatpush.msra.mxu0 0.0
    %279 = vmatpush.msra.mxu0 0.0
    %280 = vmatpush.msra.mxu0 0.0
    %281 = vmatpush.msra.mxu0 0.0
    %282 = vmatpush.msra.mxu0 %v202
    %283 = vmatpush.msra.mxu0 %v201
    %284 = vmatpush.msra.mxu0 %v200
    %285 = vmatpush.msra.mxu0 %v199
    %286 = vmatmul.f32.gmra.mxu0 %v268
    %v287 = vpop.f32.mrf.mxu0
    %v288 = vadd.f32 %v203, %v287
    %289 = vdwg.mxu0
    %290 = vmatpush.msra.mxu0 0.0
    %291 = vmatpush.msra.mxu0 0.0
    %292 = vmatpush.msra.mxu0 0.0
    %293 = vmatpush.msra.mxu0 0.0
    %294 = vmatpush.msra.mxu0 0.0
    %295 = vmatpush.msra.mxu0 0.0
    %296 = vmatpush.msra.mxu0 0.0
    %297 = vmatpush.msra.mxu0 0.0
    %298 = vmatpush.msra.mxu0 0.0
    %299 = vmatpush.msra.mxu0 0.0
    %300 = vmatpush.msra.mxu0 0.0
    %301 = vmatpush.msra.mxu0 0.0
    %302 = vmatpush.msra.mxu0 %v194
    %303 = vmatpush.msra.mxu0 %v193
    %304 = vmatpush.msra.mxu0 %v192
    %305 = vmatpush.msra.mxu0 %v191
    %306 = vmatmul.f32.gmra.mxu0 %v268
    %v307 = vpop.f32.mrf.mxu0
    %v308 = vadd.f32 0.0, %v307
    %309 = vdwg.mxu0
    %v311 = vrot.slane %v308, 7
    %v313 = vadd.f32 %v189, %v311
    %314 = vmatpush.msra.mxu0 0.0
    %315 = vmatpush.msra.mxu0 0.0
    %316 = vmatpush.msra.mxu0 0.0
    %317 = vmatpush.msra.mxu0 0.0
    %318 = vmatpush.msra.mxu0 0.0
    %319 = vmatpush.msra.mxu0 0.0
    %320 = vmatpush.msra.mxu0 0.0
    %321 = vmatpush.msra.mxu0 0.0
    %322 = vmatpush.msra.mxu0 0.0
    %323 = vmatpush.msra.mxu0 0.0
    %324 = vmatpush.msra.mxu0 0.0
    %325 = vmatpush.msra.mxu0 0.0
    %326 = vmatpush.msra.mxu0 %v198
    %327 = vmatpush.msra.mxu0 %v197
    %328 = vmatpush.msra.mxu0 %v196
    %329 = vmatpush.msra.mxu0 %v195
    %330 = vmatmul.f32.gmra.mxu0 %v205
    %v331 = vpop.f32.mrf.mxu0
    %v332 = vadd.f32 0.0, %v331
    %333 = vdwg.mxu0
    %v334 = vadd.f32 %v288, %v332
    %v335 = vxor.u32 %v313, 2147483648
    %v336 = vmul.f32 %v335, 1.442695
    %v337 = vpow.pop %v336
    %v338 = vadd.f32 %v337, 1.0
    %v339 = vrcp.pop %v338
    %v340 = vmul.f32 %v338, %v339
    %v341 = vsub.f32 1.0, %v340
    %v342 = vmul.f32 %v339, %v341
    %v343 = vadd.f32 %v339, %v342
    %vm344 = vweird.f32 %v338
    %vm345 = vweird.f32 %v339
    %vm346 = vmor %vm344, %vm345
    %v347 = vsel %vm346, %v339, %v343
    %v348 = vand.u32 2147483647, %v338
    %vm349 = vcmp.eq.f32.partialorder %v348, 8.507059e+37
    %v350 = vand.u32 %v338, 2147483648
    %v351 = vor.u32 1.1754944e-38, %v350
    %v352 = vsel %vm349, %v351, %v347
    %v353 = vmul.f32 1.0, %v352
    %v354 = vtanh.pop %v313
    %v356 = vrot.slane %v258, 7
    %v358 = vmul.f32 %v353, %v356
    %360 = vrot.lane.b32.xlu0 %v354, 32
    %v361 = vpop.permute.xlu0 %360
    %v363 = vmul.f32 %v353, %v361
    %365 = vrot.lane.b32.xlu0 %v363, 32
    %v366 = vpop.permute.xlu0 %365
    %v368 = vadd.f32 %v358, %v366
    %v369 = vtanh.pop %v368
    %371 = vrot.lane.b32.xlu0 %v369, 32
    %v372 = vpop.permute.xlu0 %371
    %v374 = vmul.f32 %v353, %v372
    %v376 = vrot.slane %v374, 1
    %377 = vrot.lane.b32.xlu0 %v376, 64
    %v378 = vpop.permute.xlu0 %377
    %v379 = vsel %vm137, %v378, 0
    %381 = vmatpush.msra.mxu0 0.0
    %382 = vmatpush.msra.mxu0 0.0
    %383 = vmatpush.msra.mxu0 0.0
    %384 = vmatpush.msra.mxu0 0.0
    %385 = vmatpush.msra.mxu0 0.0
    %386 = vmatpush.msra.mxu0 0.0
    %387 = vmatpush.msra.mxu0 0.0
    %388 = vmatpush.msra.mxu0 0.0
    %389 = vmatpush.msra.mxu0 0.0
    %390 = vmatpush.msra.mxu0 0.0
    %391 = vmatpush.msra.mxu0 0.0
    %392 = vmatpush.msra.mxu0 0.0
    %393 = vmatpush.msra.mxu0 %v202
    %394 = vmatpush.msra.mxu0 %v201
    %395 = vmatpush.msra.mxu0 %v200
    %396 = vmatpush.msra.mxu0 %v199
    %397 = vmatmul.f32.gmra.mxu0 %v379
    %v398 = vpop.f32.mrf.mxu0
    %v399 = vadd.f32 %v203, %v398
    %400 = vdwg.mxu0
    %v401 = vxor.u32 %v334, 2147483648
    %v402 = vmul.f32 %v401, 1.442695
    %v403 = vpow.pop %v402
    %v404 = vadd.f32 %v403, 1.0
    %v405 = vrcp.pop %v404
    %v406 = vmul.f32 %v404, %v405
    %v407 = vsub.f32 1.0, %v406
    %v408 = vmul.f32 %v405, %v407
    %v409 = vadd.f32 %v405, %v408
    %vm410 = vweird.f32 %v404
    %vm411 = vweird.f32 %v405
    %vm412 = vmor %vm410, %vm411
    %v413 = vsel %vm412, %v405, %v409
    %v414 = vand.u32 2147483647, %v404
    %vm415 = vcmp.eq.f32.partialorder %v414, 8.507059e+37
    %v416 = vand.u32 %v404, 2147483648
    %v417 = vor.u32 1.1754944e-38, %v416
    %v418 = vsel %vm415, %v417, %v413
    %v419 = vmul.f32 1.0, %v418
    %v420 = vtanh.pop %v334
    %v421 = vmul.f32 %v419, 0.0
    %423 = vrot.lane.b32.xlu0 %v420, 32
    %v424 = vpop.permute.xlu0 %423
    %v426 = vmul.f32 %v419, %v424
    %428 = vrot.lane.b32.xlu0 %v426, 32
    %v429 = vpop.permute.xlu0 %428
    %v431 = vadd.f32 %v421, %v429
    %v432 = vtanh.pop %v431
    %434 = vrot.lane.b32.xlu0 %v432, 32
    %v435 = vpop.permute.xlu0 %434
    %v437 = vmul.f32 %v419, %v435
    %438 = vmatpush.msra.mxu0 0.0
    %439 = vmatpush.msra.mxu0 0.0
    %440 = vmatpush.msra.mxu0 0.0
    %441 = vmatpush.msra.mxu0 0.0
    %442 = vmatpush.msra.mxu0 0.0
    %443 = vmatpush.msra.mxu0 0.0
    %444 = vmatpush.msra.mxu0 0.0
    %445 = vmatpush.msra.mxu0 0.0
    %446 = vmatpush.msra.mxu0 0.0
    %447 = vmatpush.msra.mxu0 0.0
    %448 = vmatpush.msra.mxu0 0.0
    %449 = vmatpush.msra.mxu0 0.0
    %450 = vmatpush.msra.mxu0 %v194
    %451 = vmatpush.msra.mxu0 %v193
    %452 = vmatpush.msra.mxu0 %v192
    %453 = vmatpush.msra.mxu0 %v191
    %454 = vmatmul.f32.gmra.mxu0 %v379
    %v455 = vpop.f32.mrf.mxu0
    %v456 = vadd.f32 0.0, %v455
    %457 = vdwg.mxu0
    %v459 = vrot.slane %v456, 6
    %v461 = vadd.f32 %v189, %v459
    %463 = vrot.lane.b32.xlu0 %v437, 64
    %v464 = vpop.permute.xlu0 %463
    %v465 = vsel %vm137, %v464, 0
    %467 = vmatpush.msra.mxu0 0.0
    %468 = vmatpush.msra.mxu0 0.0
    %469 = vmatpush.msra.mxu0 0.0
    %470 = vmatpush.msra.mxu0 0.0
    %471 = vmatpush.msra.mxu0 0.0
    %472 = vmatpush.msra.mxu0 0.0
    %473 = vmatpush.msra.mxu0 0.0
    %474 = vmatpush.msra.mxu0 0.0
    %475 = vmatpush.msra.mxu0 0.0
    %476 = vmatpush.msra.mxu0 0.0
    %477 = vmatpush.msra.mxu0 0.0
    %478 = vmatpush.msra.mxu0 0.0
    %479 = vmatpush.msra.mxu0 %v198
    %480 = vmatpush.msra.mxu0 %v197
    %481 = vmatpush.msra.mxu0 %v196
    %482 = vmatpush.msra.mxu0 %v195
    %483 = vmatmul.f32.gmra.mxu0 %v465
    %v484 = vpop.f32.mrf.mxu0
    %v485 = vadd.f32 0.0, %v484
    %486 = vdwg.mxu0
    %v487 = vadd.f32 %v399, %v485
    %v488 = vxor.u32 %v461, 2147483648
    %v489 = vmul.f32 %v488, 1.442695
    %v490 = vpow.pop %v489
    %v491 = vadd.f32 %v490, 1.0
    %v492 = vrcp.pop %v491
    %v493 = vmul.f32 %v491, %v492
    %v494 = vsub.f32 1.0, %v493
    %v495 = vmul.f32 %v492, %v494
    %v496 = vadd.f32 %v492, %v495
    %vm497 = vweird.f32 %v491
    %vm498 = vweird.f32 %v492
    %vm499 = vmor %vm497, %vm498
    %v500 = vsel %vm499, %v492, %v496
    %v501 = vand.u32 2147483647, %v491
    %vm502 = vcmp.eq.f32.partialorder %v501, 8.507059e+37
    %v503 = vand.u32 %v491, 2147483648
    %v504 = vor.u32 1.1754944e-38, %v503
    %v505 = vsel %vm502, %v504, %v500
    %v506 = vmul.f32 1.0, %v505
    %v507 = vtanh.pop %v461
    %v509 = vrot.slane %v368, 7
    %v511 = vmul.f32 %v506, %v509
    %513 = vrot.lane.b32.xlu0 %v507, 32
    %v514 = vpop.permute.xlu0 %513
    %v516 = vmul.f32 %v506, %v514
    %518 = vrot.lane.b32.xlu0 %v516, 32
    %v519 = vpop.permute.xlu0 %518
    %v521 = vadd.f32 %v511, %v519
    %v522 = vtanh.pop %v521
    %524 = vrot.lane.b32.xlu0 %v522, 32
    %v525 = vpop.permute.xlu0 %524
    %v527 = vmul.f32 %v506, %v525
    %v529 = vrot.slane %v527, 2
    %530 = vrot.lane.b32.xlu0 %v529, 64
    %v531 = vpop.permute.xlu0 %530
    %v532 = vsel %vm137, %v531, 0
    %534 = vmatpush.msra.mxu0 0.0
    %535 = vmatpush.msra.mxu0 0.0
    %536 = vmatpush.msra.mxu0 0.0
    %537 = vmatpush.msra.mxu0 0.0
    %538 = vmatpush.msra.mxu0 0.0
    %539 = vmatpush.msra.mxu0 0.0
    %540 = vmatpush.msra.mxu0 0.0
    %541 = vmatpush.msra.mxu0 0.0
    %542 = vmatpush.msra.mxu0 0.0
    %543 = vmatpush.msra.mxu0 0.0
    %544 = vmatpush.msra.mxu0 0.0
    %545 = vmatpush.msra.mxu0 0.0
    %546 = vmatpush.msra.mxu0 %v202
    %547 = vmatpush.msra.mxu0 %v201
    %548 = vmatpush.msra.mxu0 %v200
    %549 = vmatpush.msra.mxu0 %v199
    %550 = vmatmul.f32.gmra.mxu0 %v532
    %v551 = vpop.f32.mrf.mxu0
    %v552 = vadd.f32 %v203, %v551
    %553 = vdwg.mxu0
    %v554 = vxor.u32 %v487, 2147483648
    %v555 = vmul.f32 %v554, 1.442695
    %v556 = vpow.pop %v555
    %v557 = vadd.f32 %v556, 1.0
    %v558 = vrcp.pop %v557
    %v559 = vmul.f32 %v557, %v558
    %v560 = vsub.f32 1.0, %v559
    %v561 = vmul.f32 %v558, %v560
    %v562 = vadd.f32 %v558, %v561
    %vm563 = vweird.f32 %v557
    %vm564 = vweird.f32 %v558
    %vm565 = vmor %vm563, %vm564
    %v566 = vsel %vm565, %v558, %v562
    %v567 = vand.u32 2147483647, %v557
    %vm568 = vcmp.eq.f32.partialorder %v567, 8.507059e+37
    %v569 = vand.u32 %v557, 2147483648
    %v570 = vor.u32 1.1754944e-38, %v569
    %v571 = vsel %vm568, %v570, %v566
    %v572 = vmul.f32 1.0, %v571
    %v573 = vtanh.pop %v487
    %v574 = vmul.f32 %v572, %v431
    %576 = vrot.lane.b32.xlu0 %v573, 32
    %v577 = vpop.permute.xlu0 %576
    %v579 = vmul.f32 %v572, %v577
    %581 = vrot.lane.b32.xlu0 %v579, 32
    %v582 = vpop.permute.xlu0 %581
    %v584 = vadd.f32 %v574, %v582
    %v585 = vtanh.pop %v584
    %587 = vrot.lane.b32.xlu0 %v585, 32
    %v588 = vpop.permute.xlu0 %587
    %v590 = vmul.f32 %v572, %v588
    %591 = vmatpush.msra.mxu0 0.0
    %592 = vmatpush.msra.mxu0 0.0
    %593 = vmatpush.msra.mxu0 0.0
    %594 = vmatpush.msra.mxu0 0.0
    %595 = vmatpush.msra.mxu0 0.0
    %596 = vmatpush.msra.mxu0 0.0
    %597 = vmatpush.msra.mxu0 0.0
    %598 = vmatpush.msra.mxu0 0.0
    %599 = vmatpush.msra.mxu0 0.0
    %600 = vmatpush.msra.mxu0 0.0
    %601 = vmatpush.msra.mxu0 0.0
    %602 = vmatpush.msra.mxu0 0.0
    %603 = vmatpush.msra.mxu0 %v194
    %604 = vmatpush.msra.mxu0 %v193
    %605 = vmatpush.msra.mxu0 %v192
    %606 = vmatpush.msra.mxu0 %v191
    %607 = vmatmul.f32.gmra.mxu0 %v532
    %v608 = vpop.f32.mrf.mxu0
    %v609 = vadd.f32 0.0, %v608
    %610 = vdwg.mxu0
    %v612 = vrot.slane %v609, 5
    %v614 = vadd.f32 %v189, %v612
    %616 = vrot.lane.b32.xlu0 %v590, 64
    %v617 = vpop.permute.xlu0 %616
    %v618 = vsel %vm137, %v617, 0
    %620 = vmatpush.msra.mxu0 0.0
    %621 = vmatpush.msra.mxu0 0.0
    %622 = vmatpush.msra.mxu0 0.0
    %623 = vmatpush.msra.mxu0 0.0
    %624 = vmatpush.msra.mxu0 0.0
    %625 = vmatpush.msra.mxu0 0.0
    %626 = vmatpush.msra.mxu0 0.0
    %627 = vmatpush.msra.mxu0 0.0
    %628 = vmatpush.msra.mxu0 0.0
    %629 = vmatpush.msra.mxu0 0.0
    %630 = vmatpush.msra.mxu0 0.0
    %631 = vmatpush.msra.mxu0 0.0
    %632 = vmatpush.msra.mxu0 %v198
    %633 = vmatpush.msra.mxu0 %v197
    %634 = vmatpush.msra.mxu0 %v196
    %635 = vmatpush.msra.mxu0 %v195
    %636 = vmatmul.f32.gmra.mxu0 %v618
    %v637 = vpop.f32.mrf.mxu0
    %v638 = vadd.f32 0.0, %v637
    %639 = vdwg.mxu0
    %v640 = vadd.f32 %v552, %v638
    %v641 = vxor.u32 %v614, 2147483648
    %v642 = vmul.f32 %v641, 1.442695
    %v643 = vpow.pop %v642
    %v644 = vadd.f32 %v643, 1.0
    %v645 = vrcp.pop %v644
    %v646 = vmul.f32 %v644, %v645
    %v647 = vsub.f32 1.0, %v646
    %v648 = vmul.f32 %v645, %v647
    %v649 = vadd.f32 %v645, %v648
    %vm650 = vweird.f32 %v644
    %vm651 = vweird.f32 %v645
    %vm652 = vmor %vm650, %vm651
    %v653 = vsel %vm652, %v645, %v649
    %v654 = vand.u32 2147483647, %v644
    %vm655 = vcmp.eq.f32.partialorder %v654, 8.507059e+37
    %v656 = vand.u32 %v644, 2147483648
    %v657 = vor.u32 1.1754944e-38, %v656
    %v658 = vsel %vm655, %v657, %v653
    %v659 = vmul.f32 1.0, %v658
    %v660 = vtanh.pop %v614
    %v662 = vrot.slane %v521, 7
    %v664 = vmul.f32 %v659, %v662
    %666 = vrot.lane.b32.xlu0 %v660, 32
    %v667 = vpop.permute.xlu0 %666
    %v669 = vmul.f32 %v659, %v667
    %671 = vrot.lane.b32.xlu0 %v669, 32
    %v672 = vpop.permute.xlu0 %671
    %v674 = vadd.f32 %v664, %v672
    %v675 = vtanh.pop %v674
    %677 = vrot.lane.b32.xlu0 %v675, 32
    %v678 = vpop.permute.xlu0 %677
    %v680 = vmul.f32 %v659, %v678
    %v682 = vrot.slane %v680, 3
    %683 = vrot.lane.b32.xlu0 %v682, 64
    %v684 = vpop.permute.xlu0 %683
    %v685 = vsel %vm137, %v684, 0
    %687 = vmatpush.msra.mxu0 0.0
    %688 = vmatpush.msra.mxu0 0.0
    %689 = vmatpush.msra.mxu0 0.0
    %690 = vmatpush.msra.mxu0 0.0
    %691 = vmatpush.msra.mxu0 0.0
    %692 = vmatpush.msra.mxu0 0.0
    %693 = vmatpush.msra.mxu0 0.0
    %694 = vmatpush.msra.mxu0 0.0
    %695 = vmatpush.msra.mxu0 0.0
    %696 = vmatpush.msra.mxu0 0.0
    %697 = vmatpush.msra.mxu0 0.0
    %698 = vmatpush.msra.mxu0 0.0
    %699 = vmatpush.msra.mxu0 %v202
    %700 = vmatpush.msra.mxu0 %v201
    %701 = vmatpush.msra.mxu0 %v200
    %702 = vmatpush.msra.mxu0 %v199
    %703 = vmatmul.f32.gmra.mxu0 %v685
    %v704 = vpop.f32.mrf.mxu0
    %v705 = vadd.f32 %v203, %v704
    %706 = vdwg.mxu0
    %v707 = vxor.u32 %v640, 2147483648
    %v708 = vmul.f32 %v707, 1.442695
    %v709 = vpow.pop %v708
    %v710 = vadd.f32 %v709, 1.0
    %v711 = vrcp.pop %v710
    %v712 = vmul.f32 %v710, %v711
    %v713 = vsub.f32 1.0, %v712
    %v714 = vmul.f32 %v711, %v713
    %v715 = vadd.f32 %v711, %v714
    %vm716 = vweird.f32 %v710
    %vm717 = vweird.f32 %v711
    %vm718 = vmor %vm716, %vm717
    %v719 = vsel %vm718, %v711, %v715
    %v720 = vand.u32 2147483647, %v710
    %vm721 = vcmp.eq.f32.partialorder %v720, 8.507059e+37
    %v722 = vand.u32 %v710, 2147483648
    %v723 = vor.u32 1.1754944e-38, %v722
    %v724 = vsel %vm721, %v723, %v719
    %v725 = vmul.f32 1.0, %v724
    %v726 = vtanh.pop %v640
    %v727 = vmul.f32 %v725, %v584
    %729 = vrot.lane.b32.xlu0 %v726, 32
    %v730 = vpop.permute.xlu0 %729
    %v732 = vmul.f32 %v725, %v730
    %734 = vrot.lane.b32.xlu0 %v732, 32
    %v735 = vpop.permute.xlu0 %734
    %v737 = vadd.f32 %v727, %v735
    %v738 = vtanh.pop %v737
    %740 = vrot.lane.b32.xlu0 %v738, 32
    %v741 = vpop.permute.xlu0 %740
    %v743 = vmul.f32 %v725, %v741
    %744 = vmatpush.msra.mxu0 0.0
    %745 = vmatpush.msra.mxu0 0.0
    %746 = vmatpush.msra.mxu0 0.0
    %747 = vmatpush.msra.mxu0 0.0
    %748 = vmatpush.msra.mxu0 0.0
    %749 = vmatpush.msra.mxu0 0.0
    %750 = vmatpush.msra.mxu0 0.0
    %751 = vmatpush.msra.mxu0 0.0
    %752 = vmatpush.msra.mxu0 0.0
    %753 = vmatpush.msra.mxu0 0.0
    %754 = vmatpush.msra.mxu0 0.0
    %755 = vmatpush.msra.mxu0 0.0
    %756 = vmatpush.msra.mxu0 %v194
    %757 = vmatpush.msra.mxu0 %v193
    %758 = vmatpush.msra.mxu0 %v192
    %759 = vmatpush.msra.mxu0 %v191
    %760 = vmatmul.f32.gmra.mxu0 %v685
    %v761 = vpop.f32.mrf.mxu0
    %v762 = vadd.f32 0.0, %v761
    %763 = vdwg.mxu0
    %v765 = vrot.slane %v762, 4
    %v767 = vadd.f32 %v189, %v765
    %769 = vrot.lane.b32.xlu0 %v743, 64
    %v770 = vpop.permute.xlu0 %769
    %v771 = vsel %vm137, %v770, 0
    %773 = vmatpush.msra.mxu0 0.0
    %774 = vmatpush.msra.mxu0 0.0
    %775 = vmatpush.msra.mxu0 0.0
    %776 = vmatpush.msra.mxu0 0.0
    %777 = vmatpush.msra.mxu0 0.0
    %778 = vmatpush.msra.mxu0 0.0
    %779 = vmatpush.msra.mxu0 0.0
    %780 = vmatpush.msra.mxu0 0.0
    %781 = vmatpush.msra.mxu0 0.0
    %782 = vmatpush.msra.mxu0 0.0
    %783 = vmatpush.msra.mxu0 0.0
    %784 = vmatpush.msra.mxu0 0.0
    %785 = vmatpush.msra.mxu0 %v198
    %786 = vmatpush.msra.mxu0 %v197
    %787 = vmatpush.msra.mxu0 %v196
    %788 = vmatpush.msra.mxu0 %v195
    %789 = vmatmul.f32.gmra.mxu0 %v771
    %v790 = vpop.f32.mrf.mxu0
    %v791 = vadd.f32 0.0, %v790
    %792 = vdwg.mxu0
    %v793 = vadd.f32 %v705, %v791
    %v794 = vxor.u32 %v767, 2147483648
    %v795 = vmul.f32 %v794, 1.442695
    %v796 = vpow.pop %v795
    %v797 = vadd.f32 %v796, 1.0
    %v798 = vrcp.pop %v797
    %v799 = vmul.f32 %v797, %v798
    %v800 = vsub.f32 1.0, %v799
    %v801 = vmul.f32 %v798, %v800
    %v802 = vadd.f32 %v798, %v801
    %vm803 = vweird.f32 %v797
    %vm804 = vweird.f32 %v798
    %vm805 = vmor %vm803, %vm804
    %v806 = vsel %vm805, %v798, %v802
    %v807 = vand.u32 2147483647, %v797
    %vm808 = vcmp.eq.f32.partialorder %v807, 8.507059e+37
    %v809 = vand.u32 %v797, 2147483648
    %v810 = vor.u32 1.1754944e-38, %v809
    %v811 = vsel %vm808, %v810, %v806
    %v812 = vmul.f32 1.0, %v811
    %v813 = vtanh.pop %v767
    %v815 = vrot.slane %v674, 7
    %v817 = vmul.f32 %v812, %v815
    %819 = vrot.lane.b32.xlu0 %v813, 32
    %v820 = vpop.permute.xlu0 %819
    %v822 = vmul.f32 %v812, %v820
    %824 = vrot.lane.b32.xlu0 %v822, 32
    %v825 = vpop.permute.xlu0 %824
    %v827 = vadd.f32 %v817, %v825
    %v828 = vtanh.pop %v827
    %830 = vrot.lane.b32.xlu0 %v828, 32
    %v831 = vpop.permute.xlu0 %830
    %v833 = vmul.f32 %v812, %v831
    %v835 = vrot.slane %v833, 4
    %836 = vrot.lane.b32.xlu0 %v835, 64
    %v837 = vpop.permute.xlu0 %836
    %v838 = vsel %vm137, %v837, 0
    %840 = vmatpush.msra.mxu0 0.0
    %841 = vmatpush.msra.mxu0 0.0
    %842 = vmatpush.msra.mxu0 0.0
    %843 = vmatpush.msra.mxu0 0.0
    %844 = vmatpush.msra.mxu0 0.0
    %845 = vmatpush.msra.mxu0 0.0
    %846 = vmatpush.msra.mxu0 0.0
    %847 = vmatpush.msra.mxu0 0.0
    %848 = vmatpush.msra.mxu0 0.0
    %849 = vmatpush.msra.mxu0 0.0
    %850 = vmatpush.msra.mxu0 0.0
    %851 = vmatpush.msra.mxu0 0.0
    %852 = vmatpush.msra.mxu0 %v202
    %853 = vmatpush.msra.mxu0 %v201
    %854 = vmatpush.msra.mxu0 %v200
    %855 = vmatpush.msra.mxu0 %v199
    %856 = vmatmul.f32.gmra.mxu0 %v838
    %v857 = vpop.f32.mrf.mxu0
    %v858 = vadd.f32 %v203, %v857
    %859 = vdwg.mxu0
    %v860 = vxor.u32 %v793, 2147483648
    %v861 = vmul.f32 %v860, 1.442695
    %v862 = vpow.pop %v861
    %v863 = vadd.f32 %v862, 1.0
    %v864 = vrcp.pop %v863
    %v865 = vmul.f32 %v863, %v864
    %v866 = vsub.f32 1.0, %v865
    %v867 = vmul.f32 %v864, %v866
    %v868 = vadd.f32 %v864, %v867
    %vm869 = vweird.f32 %v863
    %vm870 = vweird.f32 %v864
    %vm871 = vmor %vm869, %vm870
    %v872 = vsel %vm871, %v864, %v868
    %v873 = vand.u32 2147483647, %v863
    %vm874 = vcmp.eq.f32.partialorder %v873, 8.507059e+37
    %v875 = vand.u32 %v863, 2147483648
    %v876 = vor.u32 1.1754944e-38, %v875
    %v877 = vsel %vm874, %v876, %v872
    %v878 = vmul.f32 1.0, %v877
    %v879 = vtanh.pop %v793
    %v880 = vmul.f32 %v878, %v737
    %882 = vrot.lane.b32.xlu0 %v879, 32
    %v883 = vpop.permute.xlu0 %882
    %v885 = vmul.f32 %v878, %v883
    %887 = vrot.lane.b32.xlu0 %v885, 32
    %v888 = vpop.permute.xlu0 %887
    %v890 = vadd.f32 %v880, %v888
    %v891 = vtanh.pop %v890
    %893 = vrot.lane.b32.xlu0 %v891, 32
    %v894 = vpop.permute.xlu0 %893
    %v896 = vmul.f32 %v878, %v894
    %897 = vmatpush.msra.mxu0 0.0
    %898 = vmatpush.msra.mxu0 0.0
    %899 = vmatpush.msra.mxu0 0.0
    %900 = vmatpush.msra.mxu0 0.0
    %901 = vmatpush.msra.mxu0 0.0
    %902 = vmatpush.msra.mxu0 0.0
    %903 = vmatpush.msra.mxu0 0.0
    %904 = vmatpush.msra.mxu0 0.0
    %905 = vmatpush.msra.mxu0 0.0
    %906 = vmatpush.msra.mxu0 0.0
    %907 = vmatpush.msra.mxu0 0.0
    %908 = vmatpush.msra.mxu0 0.0
    %909 = vmatpush.msra.mxu0 %v194
    %910 = vmatpush.msra.mxu0 %v193
    %911 = vmatpush.msra.mxu0 %v192
    %912 = vmatpush.msra.mxu0 %v191
    %913 = vmatmul.f32.gmra.mxu0 %v838
    %v914 = vpop.f32.mrf.mxu0
    %v915 = vadd.f32 0.0, %v914
    %916 = vdwg.mxu0
    %v918 = vrot.slane %v915, 3
    %v920 = vadd.f32 %v189, %v918
    %922 = vrot.lane.b32.xlu0 %v896, 64
    %v923 = vpop.permute.xlu0 %922
    %v924 = vsel %vm137, %v923, 0
    %926 = vmatpush.msra.mxu0 0.0
    %927 = vmatpush.msra.mxu0 0.0
    %928 = vmatpush.msra.mxu0 0.0
    %929 = vmatpush.msra.mxu0 0.0
    %930 = vmatpush.msra.mxu0 0.0
    %931 = vmatpush.msra.mxu0 0.0
    %932 = vmatpush.msra.mxu0 0.0
    %933 = vmatpush.msra.mxu0 0.0
    %934 = vmatpush.msra.mxu0 0.0
    %935 = vmatpush.msra.mxu0 0.0
    %936 = vmatpush.msra.mxu0 0.0
    %937 = vmatpush.msra.mxu0 0.0
    %938 = vmatpush.msra.mxu0 %v198
    %939 = vmatpush.msra.mxu0 %v197
    %940 = vmatpush.msra.mxu0 %v196
    %941 = vmatpush.msra.mxu0 %v195
    %942 = vmatmul.f32.gmra.mxu0 %v924
    %v943 = vpop.f32.mrf.mxu0
    %v944 = vadd.f32 0.0, %v943
    %945 = vdwg.mxu0
    %v946 = vadd.f32 %v858, %v944
    %v947 = vxor.u32 %v920, 2147483648
    %v948 = vmul.f32 %v947, 1.442695
    %v949 = vpow.pop %v948
    %v950 = vadd.f32 %v949, 1.0
    %v951 = vrcp.pop %v950
    %v952 = vmul.f32 %v950, %v951
    %v953 = vsub.f32 1.0, %v952
    %v954 = vmul.f32 %v951, %v953
    %v955 = vadd.f32 %v951, %v954
    %vm956 = vweird.f32 %v950
    %vm957 = vweird.f32 %v951
    %vm958 = vmor %vm956, %vm957
    %v959 = vsel %vm958, %v951, %v955
    %v960 = vand.u32 2147483647, %v950
    %vm961 = vcmp.eq.f32.partialorder %v960, 8.507059e+37
    %v962 = vand.u32 %v950, 2147483648
    %v963 = vor.u32 1.1754944e-38, %v962
    %v964 = vsel %vm961, %v963, %v959
    %v965 = vmul.f32 1.0, %v964
    %v966 = vtanh.pop %v920
    %v968 = vrot.slane %v827, 7
    %v970 = vmul.f32 %v965, %v968
    %972 = vrot.lane.b32.xlu0 %v966, 32
    %v973 = vpop.permute.xlu0 %972
    %v975 = vmul.f32 %v965, %v973
    %977 = vrot.lane.b32.xlu0 %v975, 32
    %v978 = vpop.permute.xlu0 %977
    %v980 = vadd.f32 %v970, %v978
    %v981 = vtanh.pop %v980
    %983 = vrot.lane.b32.xlu0 %v981, 32
    %v984 = vpop.permute.xlu0 %983
    %v986 = vmul.f32 %v965, %v984
    %v988 = vrot.slane %v986, 5
    %989 = vrot.lane.b32.xlu0 %v988, 64
    %v990 = vpop.permute.xlu0 %989
    %v991 = vsel %vm137, %v990, 0
    %993 = vmatpush.msra.mxu0 0.0
    %994 = vmatpush.msra.mxu0 0.0
    %995 = vmatpush.msra.mxu0 0.0
    %996 = vmatpush.msra.mxu0 0.0
    %997 = vmatpush.msra.mxu0 0.0
    %998 = vmatpush.msra.mxu0 0.0
    %999 = vmatpush.msra.mxu0 0.0
    %1000 = vmatpush.msra.mxu0 0.0
    %1001 = vmatpush.msra.mxu0 0.0
    %1002 = vmatpush.msra.mxu0 0.0
    %1003 = vmatpush.msra.mxu0 0.0
    %1004 = vmatpush.msra.mxu0 0.0
    %1005 = vmatpush.msra.mxu0 %v202
    %1006 = vmatpush.msra.mxu0 %v201
    %1007 = vmatpush.msra.mxu0 %v200
    %1008 = vmatpush.msra.mxu0 %v199
    %1009 = vmatmul.f32.gmra.mxu0 %v991
    %v1010 = vpop.f32.mrf.mxu0
    %v1011 = vadd.f32 %v203, %v1010
    %1012 = vdwg.mxu0
    %v1013 = vxor.u32 %v946, 2147483648
    %v1014 = vmul.f32 %v1013, 1.442695
    %v1015 = vpow.pop %v1014
    %v1016 = vadd.f32 %v1015, 1.0
    %v1017 = vrcp.pop %v1016
    %v1018 = vmul.f32 %v1016, %v1017
    %v1019 = vsub.f32 1.0, %v1018
    %v1020 = vmul.f32 %v1017, %v1019
    %v1021 = vadd.f32 %v1017, %v1020
    %vm1022 = vweird.f32 %v1016
    %vm1023 = vweird.f32 %v1017
    %vm1024 = vmor %vm1022, %vm1023
    %v1025 = vsel %vm1024, %v1017, %v1021
    %v1026 = vand.u32 2147483647, %v1016
    %vm1027 = vcmp.eq.f32.partialorder %v1026, 8.507059e+37
    %v1028 = vand.u32 %v1016, 2147483648
    %v1029 = vor.u32 1.1754944e-38, %v1028
    %v1030 = vsel %vm1027, %v1029, %v1025
    %v1031 = vmul.f32 1.0, %v1030
    %v1032 = vtanh.pop %v946
    %v1033 = vmul.f32 %v1031, %v890
    %1035 = vrot.lane.b32.xlu0 %v1032, 32
    %v1036 = vpop.permute.xlu0 %1035
    %v1038 = vmul.f32 %v1031, %v1036
    %1040 = vrot.lane.b32.xlu0 %v1038, 32
    %v1041 = vpop.permute.xlu0 %1040
    %v1043 = vadd.f32 %v1033, %v1041
    %v1044 = vtanh.pop %v1043
    %1046 = vrot.lane.b32.xlu0 %v1044, 32
    %v1047 = vpop.permute.xlu0 %1046
    %v1049 = vmul.f32 %v1031, %v1047
    %1050 = vmatpush.msra.mxu0 0.0
    %1051 = vmatpush.msra.mxu0 0.0
    %1052 = vmatpush.msra.mxu0 0.0
    %1053 = vmatpush.msra.mxu0 0.0
    %1054 = vmatpush.msra.mxu0 0.0
    %1055 = vmatpush.msra.mxu0 0.0
    %1056 = vmatpush.msra.mxu0 0.0
    %1057 = vmatpush.msra.mxu0 0.0
    %1058 = vmatpush.msra.mxu0 0.0
    %1059 = vmatpush.msra.mxu0 0.0
    %1060 = vmatpush.msra.mxu0 0.0
    %1061 = vmatpush.msra.mxu0 0.0
    %1062 = vmatpush.msra.mxu0 %v194
    %1063 = vmatpush.msra.mxu0 %v193
    %1064 = vmatpush.msra.mxu0 %v192
    %1065 = vmatpush.msra.mxu0 %v191
    %1066 = vmatmul.f32.gmra.mxu0 %v991
    %v1067 = vpop.f32.mrf.mxu0
    %v1068 = vadd.f32 0.0, %v1067
    %1069 = vdwg.mxu0
    %v1071 = vrot.slane %v1068, 2
    %v1073 = vadd.f32 %v189, %v1071
    %1075 = vrot.lane.b32.xlu0 %v1049, 64
    %v1076 = vpop.permute.xlu0 %1075
    %v1077 = vsel %vm137, %v1076, 0
    %1079 = vmatpush.msra.mxu0 0.0
    %1080 = vmatpush.msra.mxu0 0.0
    %1081 = vmatpush.msra.mxu0 0.0
    %1082 = vmatpush.msra.mxu0 0.0
    %1083 = vmatpush.msra.mxu0 0.0
    %1084 = vmatpush.msra.mxu0 0.0
    %1085 = vmatpush.msra.mxu0 0.0
    %1086 = vmatpush.msra.mxu0 0.0
    %1087 = vmatpush.msra.mxu0 0.0
    %1088 = vmatpush.msra.mxu0 0.0
    %1089 = vmatpush.msra.mxu0 0.0
    %1090 = vmatpush.msra.mxu0 0.0
    %1091 = vmatpush.msra.mxu0 %v198
    %1092 = vmatpush.msra.mxu0 %v197
    %1093 = vmatpush.msra.mxu0 %v196
    %1094 = vmatpush.msra.mxu0 %v195
    %1095 = vmatmul.f32.gmra.mxu0 %v1077
    %v1096 = vpop.f32.mrf.mxu0
    %v1097 = vadd.f32 0.0, %v1096
    %1098 = vdwg.mxu0
    %v1099 = vadd.f32 %v1011, %v1097
    %v1100 = vxor.u32 %v1073, 2147483648
    %v1101 = vmul.f32 %v1100, 1.442695
    %v1102 = vpow.pop %v1101
    %v1103 = vadd.f32 %v1102, 1.0
    %v1104 = vrcp.pop %v1103
    %v1105 = vmul.f32 %v1103, %v1104
    %v1106 = vsub.f32 1.0, %v1105
    %v1107 = vmul.f32 %v1104, %v1106
    %v1108 = vadd.f32 %v1104, %v1107
    %vm1109 = vweird.f32 %v1103
    %vm1110 = vweird.f32 %v1104
    %vm1111 = vmor %vm1109, %vm1110
    %v1112 = vsel %vm1111, %v1104, %v1108
    %v1113 = vand.u32 2147483647, %v1103
    %vm1114 = vcmp.eq.f32.partialorder %v1113, 8.507059e+37
    %v1115 = vand.u32 %v1103, 2147483648
    %v1116 = vor.u32 1.1754944e-38, %v1115
    %v1117 = vsel %vm1114, %v1116, %v1112
    %v1118 = vmul.f32 1.0, %v1117
    %v1119 = vtanh.pop %v1073
    %v1121 = vrot.slane %v980, 7
    %v1123 = vmul.f32 %v1118, %v1121
    %1125 = vrot.lane.b32.xlu0 %v1119, 32
    %v1126 = vpop.permute.xlu0 %1125
    %v1128 = vmul.f32 %v1118, %v1126
    %1130 = vrot.lane.b32.xlu0 %v1128, 32
    %v1131 = vpop.permute.xlu0 %1130
    %v1133 = vadd.f32 %v1123, %v1131
    %v1134 = vtanh.pop %v1133
    %1136 = vrot.lane.b32.xlu0 %v1134, 32
    %v1137 = vpop.permute.xlu0 %1136
    %v1139 = vmul.f32 %v1118, %v1137
    %v1141 = vrot.slane %v1139, 6
    %1142 = vrot.lane.b32.xlu0 %v1141, 64
    %v1143 = vpop.permute.xlu0 %1142
    %v1144 = vsel %vm137, %v1143, 0
    %1146 = vmatpush.msra.mxu0 0.0
    %1147 = vmatpush.msra.mxu0 0.0
    %1148 = vmatpush.msra.mxu0 0.0
    %1149 = vmatpush.msra.mxu0 0.0
    %1150 = vmatpush.msra.mxu0 0.0
    %1151 = vmatpush.msra.mxu0 0.0
    %1152 = vmatpush.msra.mxu0 0.0
    %1153 = vmatpush.msra.mxu0 0.0
    %1154 = vmatpush.msra.mxu0 0.0
    %1155 = vmatpush.msra.mxu0 0.0
    %1156 = vmatpush.msra.mxu0 0.0
    %1157 = vmatpush.msra.mxu0 0.0
    %1158 = vmatpush.msra.mxu0 %v202
    %1159 = vmatpush.msra.mxu0 %v201
    %1160 = vmatpush.msra.mxu0 %v200
    %1161 = vmatpush.msra.mxu0 %v199
    %1162 = vmatmul.f32.gmra.mxu0 %v1144
    %v1163 = vpop.f32.mrf.mxu0
    %v1164 = vadd.f32 %v203, %v1163
    %1165 = vdwg.mxu0
    %v1166 = vxor.u32 %v1099, 2147483648
    %v1167 = vmul.f32 %v1166, 1.442695
    %v1168 = vpow.pop %v1167
    %v1169 = vadd.f32 %v1168, 1.0
    %v1170 = vrcp.pop %v1169
    %v1171 = vmul.f32 %v1169, %v1170
    %v1172 = vsub.f32 1.0, %v1171
    %v1173 = vmul.f32 %v1170, %v1172
    %v1174 = vadd.f32 %v1170, %v1173
    %vm1175 = vweird.f32 %v1169
    %vm1176 = vweird.f32 %v1170
    %vm1177 = vmor %vm1175, %vm1176
    %v1178 = vsel %vm1177, %v1170, %v1174
    %v1179 = vand.u32 2147483647, %v1169
    %vm1180 = vcmp.eq.f32.partialorder %v1179, 8.507059e+37
    %v1181 = vand.u32 %v1169, 2147483648
    %v1182 = vor.u32 1.1754944e-38, %v1181
    %v1183 = vsel %vm1180, %v1182, %v1178
    %v1184 = vmul.f32 1.0, %v1183
    %v1185 = vtanh.pop %v1099
    %v1186 = vmul.f32 %v1184, %v1043
    %1188 = vrot.lane.b32.xlu0 %v1185, 32
    %v1189 = vpop.permute.xlu0 %1188
    %v1191 = vmul.f32 %v1184, %v1189
    %1193 = vrot.lane.b32.xlu0 %v1191, 32
    %v1194 = vpop.permute.xlu0 %1193
    %v1196 = vadd.f32 %v1186, %v1194
    %v1197 = vtanh.pop %v1196
    %1199 = vrot.lane.b32.xlu0 %v1197, 32
    %v1200 = vpop.permute.xlu0 %1199
    %v1202 = vmul.f32 %v1184, %v1200
    %1203 = vmatpush.msra.mxu0 0.0
    %1204 = vmatpush.msra.mxu0 0.0
    %1205 = vmatpush.msra.mxu0 0.0
    %1206 = vmatpush.msra.mxu0 0.0
    %1207 = vmatpush.msra.mxu0 0.0
    %1208 = vmatpush.msra.mxu0 0.0
    %1209 = vmatpush.msra.mxu0 0.0
    %1210 = vmatpush.msra.mxu0 0.0
    %1211 = vmatpush.msra.mxu0 0.0
    %1212 = vmatpush.msra.mxu0 0.0
    %1213 = vmatpush.msra.mxu0 0.0
    %1214 = vmatpush.msra.mxu0 0.0
    %1215 = vmatpush.msra.mxu0 %v194
    %1216 = vmatpush.msra.mxu0 %v193
    %1217 = vmatpush.msra.mxu0 %v192
    %1218 = vmatpush.msra.mxu0 %v191
    %1219 = vmatmul.f32.gmra.mxu0 %v1144
    %v1220 = vpop.f32.mrf.mxu0
    %v1221 = vadd.f32 0.0, %v1220
    %1222 = vdwg.mxu0
    %v1224 = vrot.slane %v1221, 1
    %v1226 = vadd.f32 %v189, %v1224
    %1228 = vrot.lane.b32.xlu0 %v1202, 64
    %v1229 = vpop.permute.xlu0 %1228
    %v1230 = vsel %vm137, %v1229, 0
    %1232 = vmatpush.msra.mxu0 0.0
    %1233 = vmatpush.msra.mxu0 0.0
    %1234 = vmatpush.msra.mxu0 0.0
    %1235 = vmatpush.msra.mxu0 0.0
    %1236 = vmatpush.msra.mxu0 0.0
    %1237 = vmatpush.msra.mxu0 0.0
    %1238 = vmatpush.msra.mxu0 0.0
    %1239 = vmatpush.msra.mxu0 0.0
    %1240 = vmatpush.msra.mxu0 0.0
    %1241 = vmatpush.msra.mxu0 0.0
    %1242 = vmatpush.msra.mxu0 0.0
    %1243 = vmatpush.msra.mxu0 0.0
    %1244 = vmatpush.msra.mxu0 %v198
    %1245 = vmatpush.msra.mxu0 %v197
    %1246 = vmatpush.msra.mxu0 %v196
    %1247 = vmatpush.msra.mxu0 %v195
    %1248 = vmatmul.f32.gmra.mxu0 %v1230
    %v1249 = vpop.f32.mrf.mxu0
    %v1250 = vadd.f32 0.0, %v1249
    %1251 = vdwg.mxu0
    %v1252 = vadd.f32 %v1164, %v1250
    %v1253 = vxor.u32 %v1226, 2147483648
    %v1254 = vmul.f32 %v1253, 1.442695
    %v1255 = vpow.pop %v1254
    %v1256 = vadd.f32 %v1255, 1.0
    %v1257 = vrcp.pop %v1256
    %v1258 = vmul.f32 %v1256, %v1257
    %v1259 = vsub.f32 1.0, %v1258
    %v1260 = vmul.f32 %v1257, %v1259
    %v1261 = vadd.f32 %v1257, %v1260
    %vm1262 = vweird.f32 %v1256
    %vm1263 = vweird.f32 %v1257
    %vm1264 = vmor %vm1262, %vm1263
    %v1265 = vsel %vm1264, %v1257, %v1261
    %v1266 = vand.u32 2147483647, %v1256
    %vm1267 = vcmp.eq.f32.partialorder %v1266, 8.507059e+37
    %v1268 = vand.u32 %v1256, 2147483648
    %v1269 = vor.u32 1.1754944e-38, %v1268
    %v1270 = vsel %vm1267, %v1269, %v1265
    %v1271 = vmul.f32 1.0, %v1270
    %v1272 = vtanh.pop %v1226
    %v1274 = vrot.slane %v1133, 7
    %v1276 = vmul.f32 %v1271, %v1274
    %1278 = vrot.lane.b32.xlu0 %v1272, 32
    %v1279 = vpop.permute.xlu0 %1278
    %v1281 = vmul.f32 %v1271, %v1279
    %1283 = vrot.lane.b32.xlu0 %v1281, 32
    %v1284 = vpop.permute.xlu0 %1283
    %v1286 = vadd.f32 %v1276, %v1284
    %v1287 = vtanh.pop %v1286
    %1289 = vrot.lane.b32.xlu0 %v1287, 32
    %v1290 = vpop.permute.xlu0 %1289
    %v1292 = vmul.f32 %v1271, %v1290
    %v1294 = vrot.slane %v1292, 7
    %1295 = vrot.lane.b32.xlu0 %v1294, 64
    %v1296 = vpop.permute.xlu0 %1295
    %v1297 = vsel %vm137, %v1296, 0
    %1299 = vmatpush.msra.mxu0 0.0
    %1300 = vmatpush.msra.mxu0 0.0
    %1301 = vmatpush.msra.mxu0 0.0
    %1302 = vmatpush.msra.mxu0 0.0
    %1303 = vmatpush.msra.mxu0 0.0
    %1304 = vmatpush.msra.mxu0 0.0
    %1305 = vmatpush.msra.mxu0 0.0
    %1306 = vmatpush.msra.mxu0 0.0
    %1307 = vmatpush.msra.mxu0 0.0
    %1308 = vmatpush.msra.mxu0 0.0
    %1309 = vmatpush.msra.mxu0 0.0
    %1310 = vmatpush.msra.mxu0 0.0
    %1311 = vmatpush.msra.mxu0 %v202
    %1312 = vmatpush.msra.mxu0 %v201
    %1313 = vmatpush.msra.mxu0 %v200
    %1314 = vmatpush.msra.mxu0 %v199
    %1315 = vmatmul.f32.gmra.mxu0 %v1297
    %v1316 = vpop.f32.mrf.mxu0
    %v1317 = vadd.f32 %v203, %v1316
    %1318 = vdwg.mxu0
    %v1319 = vxor.u32 %v1252, 2147483648
    %v1320 = vmul.f32 %v1319, 1.442695
    %v1321 = vpow.pop %v1320
    %v1322 = vadd.f32 %v1321, 1.0
    %v1323 = vrcp.pop %v1322
    %v1324 = vmul.f32 %v1322, %v1323
    %v1325 = vsub.f32 1.0, %v1324
    %v1326 = vmul.f32 %v1323, %v1325
    %v1327 = vadd.f32 %v1323, %v1326
    %vm1328 = vweird.f32 %v1322
    %vm1329 = vweird.f32 %v1323
    %vm1330 = vmor %vm1328, %vm1329
    %v1331 = vsel %vm1330, %v1323, %v1327
    %v1332 = vand.u32 2147483647, %v1322
    %vm1333 = vcmp.eq.f32.partialorder %v1332, 8.507059e+37
    %v1334 = vand.u32 %v1322, 2147483648
    %v1335 = vor.u32 1.1754944e-38, %v1334
    %v1336 = vsel %vm1333, %v1335, %v1331
    %v1337 = vmul.f32 1.0, %v1336
    %v1338 = vtanh.pop %v1252
    %v1339 = vmul.f32 %v1337, %v1196
    %1341 = vrot.lane.b32.xlu0 %v1338, 32
    %v1342 = vpop.permute.xlu0 %1341
    %v1344 = vmul.f32 %v1337, %v1342
    %1346 = vrot.lane.b32.xlu0 %v1344, 32
    %v1347 = vpop.permute.xlu0 %1346
    %v1349 = vadd.f32 %v1339, %v1347
    %v1350 = vtanh.pop %v1349
    %1352 = vrot.lane.b32.xlu0 %v1350, 32
    %v1353 = vpop.permute.xlu0 %1352
    %v1355 = vmul.f32 %v1337, %v1353
    %1357 = vrot.lane.b32.xlu0 %v1355, 64
    %v1358 = vpop.permute.xlu0 %1357
    %v1359 = vsel %vm137, %v1358, 0
    %1361 = vmatpush.msra.mxu0 0.0
    %1362 = vmatpush.msra.mxu0 0.0
    %1363 = vmatpush.msra.mxu0 0.0
    %1364 = vmatpush.msra.mxu0 0.0
    %1365 = vmatpush.msra.mxu0 0.0
    %1366 = vmatpush.msra.mxu0 0.0
    %1367 = vmatpush.msra.mxu0 0.0
    %1368 = vmatpush.msra.mxu0 0.0
    %1369 = vmatpush.msra.mxu0 0.0
    %1370 = vmatpush.msra.mxu0 0.0
    %1371 = vmatpush.msra.mxu0 0.0
    %1372 = vmatpush.msra.mxu0 0.0
    %1373 = vmatpush.msra.mxu0 %v198
    %1374 = vmatpush.msra.mxu0 %v197
    %1375 = vmatpush.msra.mxu0 %v196
    %1376 = vmatpush.msra.mxu0 %v195
    %1377 = vmatmul.f32.gmra.mxu0 %v1359
    %v1378 = vpop.f32.mrf.mxu0
    %v1379 = vadd.f32 0.0, %v1378
    %1380 = vdwg.mxu0
    %v1381 = vadd.f32 %v1317, %v1379
    %v1382 = vxor.u32 %v1381, 2147483648
    %v1383 = vmul.f32 %v1382, 1.442695
    %v1384 = vpow.pop %v1383
    %v1385 = vadd.f32 %v1384, 1.0
    %v1386 = vrcp.pop %v1385
    %v1387 = vmul.f32 %v1385, %v1386
    %v1388 = vsub.f32 1.0, %v1387
    %v1389 = vmul.f32 %v1386, %v1388
    %v1390 = vadd.f32 %v1386, %v1389
    %vm1391 = vweird.f32 %v1385
    %vm1392 = vweird.f32 %v1386
    %vm1393 = vmor %vm1391, %vm1392
    %v1394 = vsel %vm1393, %v1386, %v1390
    %v1395 = vand.u32 2147483647, %v1385
    %vm1396 = vcmp.eq.f32.partialorder %v1395, 8.507059e+37
    %v1397 = vand.u32 %v1385, 2147483648
    %v1398 = vor.u32 1.1754944e-38, %v1397
    %v1399 = vsel %vm1396, %v1398, %v1394
    %v1400 = vmul.f32 1.0, %v1399
    %v1401 = vtanh.pop %v1381
    %v1402 = vmul.f32 %v1400, %v1349
    %1404 = vrot.lane.b32.xlu0 %v1401, 32
    %v1405 = vpop.permute.xlu0 %1404
    %v1407 = vmul.f32 %v1400, %v1405
    %1409 = vrot.lane.b32.xlu0 %v1407, 32
    %v1410 = vpop.permute.xlu0 %1409
    %v1412 = vadd.f32 %v1402, %v1410
    %v1413 = vtanh.pop %v1412
    %1415 = vrot.lane.b32.xlu0 %v1413, 32
    %v1416 = vpop.permute.xlu0 %1415
    %v1418 = vmul.f32 %v1400, %v1416
    %v1419 = vrot.slane %v590, 7
    %v1421 = vrot.slane %v743, 6
    %v1423 = vrot.slane %v896, 5
    %v1425 = vrot.slane %v1049, 4
    %v1427 = vrot.slane %v1202, 3
    %v1429 = vrot.slane %v1355, 2
    %v1432 = vrot.slane %v1418, 1
    %vm1434 = vcmask 1040384
    %v1435 = vsel %vm1434, %v437, %v1419
    %vm1436 = vcmask 1041408
    %v1437 = vsel %vm1436, %v1435, %v1421
    %vm1438 = vcmask 1042432
    %v1439 = vsel %vm1438, %v1437, %v1423
    %vm1440 = vcmask 1043456
    %v1441 = vsel %vm1440, %v1439, %v1425
    %vm1442 = vcmask 1044480
    %v1443 = vsel %vm1442, %v1441, %v1427
    %vm1444 = vcmask 1045504
    %v1445 = vsel %vm1444, %v1443, %v1429
    %vm1446 = vcmask 1046528
    %v1447 = vsel %vm1446, %v1445, %v1432
    %v1448 = vld [vmem:[#allocation10] sm:$0xff]
    %v1449 = vld [vmem:[#allocation10 + $0x8] sm:$0xff]
    %v1450 = vld [vmem:[#allocation10 + $0x10] sm:$0xff]
    %v1451 = vld [vmem:[#allocation10 + $0x18] sm:$0xff]
    %v1452 = vld [vmem:[#allocation11] sm:$0x1]
    %v1454 = vperm.slane %v1452, 0
    %1457 = vrot.lane.b32.xlu0 %v1447, 64
    %v1458 = vpop.permute.xlu0 %1457
    %v1459 = vsel %vm137, %v1458, 0
    %1461 = vmatpush.msra.mxu0 0.0
    %1462 = vmatpush.msra.mxu0 0.0
    %1463 = vmatpush.msra.mxu0 0.0
    %1464 = vmatpush.msra.mxu0 0.0
    %1465 = vmatpush.msra.mxu0 0.0
    %1466 = vmatpush.msra.mxu0 0.0
    %1467 = vmatpush.msra.mxu0 0.0
    %1468 = vmatpush.msra.mxu0 0.0
    %1469 = vmatpush.msra.mxu0 0.0
    %1470 = vmatpush.msra.mxu0 0.0
    %1471 = vmatpush.msra.mxu0 0.0
    %1472 = vmatpush.msra.mxu0 0.0
    %1473 = vmatpush.msra.mxu0 %v1451
    %1474 = vmatpush.msra.mxu0 %v1450
    %1475 = vmatpush.msra.mxu0 %v1449
    %1476 = vmatpush.msra.mxu0 %v1448
    %1477 = vmatmul.f32.gmra.mxu0 %v1459
    %v1478 = vpop.f32.mrf.mxu0
    %v1479 = vadd.f32 %v1454, %v1478
    %1480 = vdwg.mxu0
    %1481 = vst [vmem:[#allocation13] sm:$0xff] %v1479
    // Predicated region
    $region66: #{lstm_network_forward.1} parent=1 // pred_check
      _
    $region67: #{lstm_network_forward.1} parent=1 // pred_check_branch
      %1483 = sbr.rel (0) target = $region69
    $region68: #{lstm_network_forward.1} parent=1 // pred_region
      %1485 = vsyncadd [#allocation4], 0
      %s1487 = sshll.u32 [#allocation13], 4
      %s1488 = int_to_ptr.vmem [resolvable:$true] %s1487
      %s1489 = sshll.u32 %s10, 4
      %s1490 = int_to_ptr.hbm [resolvable:$true] %s1489
      %1492 = dma.vmem_to_hbm [thread:$0]  %s1488, 128, %s1490, [#allocation4]
    $region69: #{lstm_network_forward.1} parent=1 // pred_fallthru
      _
    // Predicated region
    $region70: #{lstm_network_forward.1} parent=1 // pred_check
      _
    $region71: #{lstm_network_forward.1} parent=1 // pred_check_branch
      %1494 = sbr.rel (0) target = $region73
    $region72: #{lstm_network_forward.1} parent=1 // pred_region
      %1496 = dma.done [#allocation4], 128
    $region73: #{lstm_network_forward.1} parent=1 // pred_fallthru
      _
    %1497 = vsyncpa [#allocation3], 1
    %1498 = vsyncpa [#allocation6], 1
    %1499 = vsyncpa [#allocation9], 1
    %1500 = vsyncpa [#allocation12], 1
    %1501 = vsyncpa [#allocation4], 1

</llo_original>
